<compile_context>
chip_gen: v7x
topology: tpu7x:2x2x1
jax: 0.10.0
libtpu: 0.0.40
codegen_flags: <defaults>
</compile_context>

<pallas_src>
import jax
import jax.numpy as jnp
from jax.experimental import pallas as pl
from jax.experimental.pallas import tpu as pltpu

# ---------------- model hyper-parameters (synthetic `args`) ----------------
NUM_RATINGS = 3      # len(args.rating_vals)
SRC_IN      = 16     # args.src_in_units
DST_IN      = 16     # args.dst_in_units
AGG_UNITS   = 24     # args.gcn_agg_units  ('sum' accumulation)
OUT_UNITS   = 16     # args.gcn_out_units
LAYERS      = 2      # args.layers (fused kernel below is written for exactly 2 layers)
BASIS_UNITS = 4      # GCMCLayer basis_units
NUM_BASIS   = 2      # args.gen_r_num_basis_func
NUM_USERS   = 8
NUM_ITEMS   = 8
NUM_EDGES   = 8      # dec_graph edge count
LEAKY_SLOPE = 0.1    # get_activation -> nn.LeakyReLU(0.1) agg activation

_VMEM = pl.BlockSpec(memory_space=pltpu.MemorySpace.VMEM)
_SMEM = pl.BlockSpec(memory_space=pltpu.MemorySpace.SMEM)


# ------------------------- fused forward kernel ----------------------------
def _fused_net_kernel(
    ufeat_ref, ifeat_ref, adj_iu_ref, adj_ui_ref,
    att0_ref, basis0_ref, ufc0_w_ref, ufc0_b_ref, ifc0_w_ref, ifc0_b_ref,
    att1_ref, basis1_ref, ufc1_w_ref, ufc1_b_ref, ifc1_w_ref, ifc1_b_ref,
    p_ref, comb_ref, sel_u_ref, sel_i_ref,
    pred_ref, uout_ref, mout_ref, w_ref, reg_ref,
):
    f32 = jnp.float32

    def rating_weights(att_ref, basis_ref):
        # basis decomposition: W_r = sum_b att[r, b] * basis[b]   (att scalars read from SMEM)
        ws = []
        for r in range(NUM_RATINGS):
            w_r = att_ref[r, 0] * basis_ref[0]
            for b in range(1, BASIS_UNITS):
                w_r = w_r + att_ref[r, b] * basis_ref[b]
            ws.append(w_r)                                  # (Din, M)
        return ws

    def aggregate(feat, w_list, adj_cat):
        # all ratings' messages stacked along sublanes, then ONE wide adjacency matmul
        # (contraction dim R*Ns) instead of R separate (Nd,Ns)x(Ns,M) MXU pushes.
        msg_stack = jnp.concatenate(
            [jnp.dot(feat, w_r, preferred_element_type=f32) for w_r in w_list], axis=0)
        acc = jnp.dot(adj_cat, msg_stack, preferred_element_type=f32)   # 'sum' accumulation
        return jnp.where(acc > 0, acc, LEAKY_SLOPE * acc)               # LeakyReLU agg act

    ufeat = ufeat_ref[...]
    ifeat = ifeat_ref[...]
    adj_iu = adj_iu_ref[...]        # (Ni, R*Nu)  user -> item, ratings concatenated on lanes
    adj_ui = adj_ui_ref[...]        # (Nu, R*Ni)  item -> user

    # ------------------------------ encoder layer 0 ------------------------------
    w0 = rating_weights(att0_ref, basis0_ref)               # list of (SRC_IN, AGG_UNITS)
    item_agg0 = aggregate(ufeat, w0, adj_iu)                # (Ni, AGG_UNITS)
    user_agg0 = aggregate(ifeat, w0, adj_ui)                # (Nu, AGG_UNITS)
    user_o0 = jnp.dot(user_agg0, ufc0_w_ref[...], preferred_element_type=f32) + ufc0_b_ref[...]
    movie_o0 = jnp.dot(item_agg0, ifc0_w_ref[...], preferred_element_type=f32) + ifc0_b_ref[...]

    # ------------------------------ encoder layer 1 ------------------------------
    w1 = rating_weights(att1_ref, basis1_ref)               # list of (OUT_UNITS, OUT_UNITS)
    item_agg1 = aggregate(user_o0, w1, adj_iu)
    user_agg1 = aggregate(movie_o0, w1, adj_ui)
    user_o1 = jnp.dot(user_agg1, ufc1_w_ref[...], preferred_element_type=f32) + ufc1_b_ref[...]
    movie_o1 = jnp.dot(item_agg1, ifc1_w_ref[...], preferred_element_type=f32) + ifc1_b_ref[...]

    # layer accumulation: out = o_0 + o_1 / 2   (user_out += user_o / (i + 1))
    user_out = user_o0 + user_o1 * 0.5
    movie_out = movie_o0 + movie_o1 * 0.5
    uout_ref[...] = user_out
    mout_ref[...] = movie_out

    # ------------------------------ BiDecoder ------------------------------------
    # endpoint gather as one-hot selection matmuls; user_out/movie_out never leave VMEM
    u_e = jnp.dot(sel_u_ref[...], user_out, preferred_element_type=f32)     # (E, D)
    v_e = jnp.dot(sel_i_ref[...], movie_out, preferred_element_type=f32)    # (E, D)
    pred = jnp.zeros((NUM_EDGES, NUM_RATINGS), f32)
    for b in range(NUM_BASIS):
        t_b = jnp.dot(u_e, p_ref[b], preferred_element_type=f32)            # (E, D)
        s_b = jnp.sum(t_b * v_e, axis=1, keepdims=True)                     # (E, 1)
        # outer-product accumulate == (s @ combine); avoids concatenating 1-lane columns
        pred = pred + s_b * comb_ref[b:b + 1, :]
    pred_ref[...] = pred

    # ---------------- W output + cosine-similarity reg (reuse layer-0 W) ---------
    eps2 = 1e-16                                            # torch eps=1e-8, clamped per norm
    total = jnp.zeros((1, 1), f32)
    for r in range(NUM_RATINGS):
        w_ref[r, :, :] = w0[r]
        if r > 0:
            a, c = w0[r], w0[r - 1]
            dot_ac = jnp.sum(a * c, axis=1, keepdims=True)
            na2 = jnp.sum(a * a, axis=1, keepdims=True)
            nc2 = jnp.sum(c * c, axis=1, keepdims=True)
            cos = (dot_ac
                   * jax.lax.rsqrt(jnp.maximum(na2, eps2))
                   * jax.lax.rsqrt(jnp.maximum(nc2, eps2)))                 # (S, 1)
            total = total - jnp.sum(cos, axis=0, keepdims=True)             # (1, 1)
    reg_ref[...] = total


# ------------------------------ model glue ---------------------------------
def net_forward(params, adj_iu, adj_ui, dec_uid, dec_iid, ufeat, ifeat):
    """Single fused pallas_call for the whole Net forward (2 encoder layers + decoder + reg)."""
    assert LAYERS == 2 and len(params["encoder"]) == 2
    enc0, enc1 = params["encoder"]
    dec = params["decoder"]

    # ---- layout-only glue (no model compute) ----
    # per-rating adjacency concatenated along the source axis -> one wide MXU contraction
    adj_cat_iu = jnp.transpose(adj_iu, (1, 0, 2)).reshape(NUM_ITEMS, NUM_RATINGS * NUM_USERS)
    adj_cat_ui = jnp.transpose(adj_ui, (1, 0, 2)).reshape(NUM_USERS, NUM_RATINGS * NUM_ITEMS)
    # dec_graph endpoint gather as one-hot selection matrices (consumed by MXU in-kernel)
    sel_u = jax.nn.one_hot(dec_uid, NUM_USERS, dtype=jnp.float32)
    sel_i = jax.nn.one_hot(dec_iid, NUM_ITEMS, dtype=jnp.float32)

    out_shape = (
        jax.ShapeDtypeStruct((NUM_EDGES, NUM_RATINGS), jnp.float32),          # pred_ratings
        jax.ShapeDtypeStruct((NUM_USERS, OUT_UNITS), jnp.float32),            # user_out
        jax.ShapeDtypeStruct((NUM_ITEMS, OUT_UNITS), jnp.float32),            # movie_out
        jax.ShapeDtypeStruct((NUM_RATINGS, SRC_IN, AGG_UNITS), jnp.float32),  # W
        jax.ShapeDtypeStruct((1, 1), jnp.float32),                            # reg_loss
    )
    in_specs = [
        _VMEM, _VMEM, _VMEM, _VMEM,                          # ufeat, ifeat, adj_iu, adj_ui
        _SMEM, _VMEM, _VMEM, _VMEM, _VMEM, _VMEM,            # layer-0 params (att in SMEM)
        _SMEM, _VMEM, _VMEM, _VMEM, _VMEM, _VMEM,            # layer-1 params (att in SMEM)
        _VMEM, _VMEM, _VMEM, _VMEM,                          # decoder P, combine, sel_u, sel_i
    ]

    pred, user_out, movie_out, W, reg = pl.pallas_call(
        _fused_net_kernel,
        in_specs=in_specs,
        out_specs=(_VMEM, _VMEM, _VMEM, _VMEM, _VMEM),
        out_shape=out_shape,
    )(
        ufeat, ifeat, adj_cat_iu, adj_cat_ui,
        enc0["att"], enc0["basis"], enc0["ufc_w"], enc0["ufc_b"], enc0["ifc_w"], enc0["ifc_b"],
        enc1["att"], enc1["basis"], enc1["ufc_w"], enc1["ufc_b"], enc1["ifc_w"], enc1["ifc_b"],
        dec["P"], dec["combine"], sel_u, sel_i,
    )
    return pred, reg[0, 0], user_out, movie_out, W


def init_net_params(key):
    ks = iter(jax.random.split(key, 32))

    def nrm(shape, scale=0.1):
        return (scale * jax.random.normal(next(ks), shape)).astype(jnp.float32)

    encoder = [dict(
        att=nrm((NUM_RATINGS, BASIS_UNITS)),
        basis=nrm((BASIS_UNITS, SRC_IN, AGG_UNITS)),
        ufc_w=nrm((AGG_UNITS, OUT_UNITS)),
        ufc_b=jnp.zeros((1, OUT_UNITS), jnp.float32),
        ifc_w=nrm((AGG_UNITS, OUT_UNITS)),
        ifc_b=jnp.zeros((1, OUT_UNITS), jnp.float32),
    )]
    for _ in range(1, LAYERS):
        encoder.append(dict(
            att=nrm((NUM_RATINGS, BASIS_UNITS)),
            basis=nrm((BASIS_UNITS, OUT_UNITS, OUT_UNITS)),
            ufc_w=nrm((OUT_UNITS, OUT_UNITS)),
            ufc_b=jnp.zeros((1, OUT_UNITS), jnp.float32),
            ifc_w=nrm((OUT_UNITS, OUT_UNITS)),
            ifc_b=jnp.zeros((1, OUT_UNITS), jnp.float32),
        ))
    decoder = dict(
        P=nrm((NUM_BASIS, OUT_UNITS, OUT_UNITS)),
        combine=nrm((NUM_BASIS, NUM_RATINGS)),
    )
    return dict(encoder=encoder, decoder=decoder)


if __name__ == "__main__":
    key = jax.random.PRNGKey(0)
    kp, ka, km, ku, ki = jax.random.split(key, 5)

    params = init_net_params(kp)

    # dense per-rating bipartite adjacency (R, Ni, Nu) with GCMC symmetric degree norm
    ratings = jax.random.randint(ka, (NUM_ITEMS, NUM_USERS), 0, NUM_RATINGS)
    mask = jax.random.bernoulli(km, 0.6, (NUM_ITEMS, NUM_USERS))
    adj = jnp.stack(
        [(mask & (ratings == r)).astype(jnp.float32) for r in range(NUM_RATINGS)]
    )
    deg_i = jnp.maximum(adj.sum(axis=(0, 2)), 1.0)
    deg_u = jnp.maximum(adj.sum(axis=(0, 1)), 1.0)
    ci = 1.0 / jnp.sqrt(deg_i)
    cu = 1.0 / jnp.sqrt(deg_u)
    adj_iu = adj * ci[None, :, None] * cu[None, None, :]    # user -> item direction
    adj_ui = jnp.transpose(adj_iu, (0, 2, 1))               # item -> user direction

    # dec_graph edge list
    dec_uid = jnp.arange(NUM_EDGES, dtype=jnp.int32) % NUM_USERS
    dec_iid = (jnp.arange(NUM_EDGES, dtype=jnp.int32) * 3 + 1) % NUM_ITEMS

    ufeat = jax.random.normal(ku, (NUM_USERS, SRC_IN), jnp.float32)
    ifeat = jax.random.normal(ki, (NUM_ITEMS, DST_IN), jnp.float32)

    fwd = jax.jit(net_forward)
    pred, reg, u_out, m_out, W = fwd(
        params, adj_iu, adj_ui, dec_uid, dec_iid, ufeat, ifeat
    )
    jax.block_until_ready((pred, reg, u_out, m_out, W))
    print("KERNEL_OK")
</pallas_src>

<mosaic_0001>
module attributes {stable_mosaic.version = 11 : i64} {
  func.func @_fused_net_kernel(%arg0: memref<8x16xf32, #tpu.memory_space<vmem>>, %arg1: memref<8x16xf32, #tpu.memory_space<vmem>>, %arg2: memref<8x24xf32, #tpu.memory_space<vmem>>, %arg3: memref<8x24xf32, #tpu.memory_space<vmem>>, %arg4: memref<3x4xf32, #tpu.memory_space<smem>>, %arg5: memref<4x16x24xf32, #tpu.memory_space<vmem>>, %arg6: memref<24x16xf32, #tpu.memory_space<vmem>>, %arg7: memref<1x16xf32, #tpu.memory_space<vmem>>, %arg8: memref<24x16xf32, #tpu.memory_space<vmem>>, %arg9: memref<1x16xf32, #tpu.memory_space<vmem>>, %arg10: memref<3x4xf32, #tpu.memory_space<smem>>, %arg11: memref<4x16x16xf32, #tpu.memory_space<vmem>>, %arg12: memref<16x16xf32, #tpu.memory_space<vmem>>, %arg13: memref<1x16xf32, #tpu.memory_space<vmem>>, %arg14: memref<16x16xf32, #tpu.memory_space<vmem>>, %arg15: memref<1x16xf32, #tpu.memory_space<vmem>>, %arg16: memref<2x16x16xf32, #tpu.memory_space<vmem>>, %arg17: memref<2x3xf32, #tpu.memory_space<vmem>>, %arg18: memref<8x8xf32, #tpu.memory_space<vmem>>, %arg19: memref<8x8xf32, #tpu.memory_space<vmem>>, %arg20: memref<8x3xf32, #tpu.memory_space<vmem>>, %arg21: memref<8x16xf32, #tpu.memory_space<vmem>>, %arg22: memref<8x16xf32, #tpu.memory_space<vmem>>, %arg23: memref<3x16x24xf32, #tpu.memory_space<vmem>>, %arg24: memref<1x1xf32, #tpu.memory_space<vmem>>) attributes {dimension_semantics = [], scalar_prefetch = 0 : i64, scratch_operands = 0 : i64, tpu.core_type = #tpu.core_type<tc>} {
    %c0 = arith.constant 0 : index
    %c0_0 = arith.constant 0 : index
    %0 = vector.load %arg0[%c0, %c0_0] : memref<8x16xf32, #tpu.memory_space<vmem>>, vector<8x16xf32>
    %c0_1 = arith.constant 0 : index
    %c0_2 = arith.constant 0 : index
    %1 = vector.load %arg1[%c0_1, %c0_2] : memref<8x16xf32, #tpu.memory_space<vmem>>, vector<8x16xf32>
    %c0_3 = arith.constant 0 : index
    %c0_4 = arith.constant 0 : index
    %2 = vector.load %arg2[%c0_3, %c0_4] : memref<8x24xf32, #tpu.memory_space<vmem>>, vector<8x24xf32>
    %c0_5 = arith.constant 0 : index
    %c0_6 = arith.constant 0 : index
    %3 = vector.load %arg3[%c0_5, %c0_6] : memref<8x24xf32, #tpu.memory_space<vmem>>, vector<8x24xf32>
    %c0_7 = arith.constant 0 : index
    %c0_8 = arith.constant 0 : index
    %4 = memref.load %arg4[%c0_7, %c0_8] : memref<3x4xf32, #tpu.memory_space<smem>>
    %c0_9 = arith.constant 0 : index
    %c0_10 = arith.constant 0 : index
    %c0_11 = arith.constant 0 : index
    %5 = vector.load %arg5[%c0_9, %c0_10, %c0_11] : memref<4x16x24xf32, #tpu.memory_space<vmem>>, vector<1x16x24xf32>
    %6 = vector.shape_cast %5 : vector<1x16x24xf32> to vector<16x24xf32>
    %7 = vector.broadcast %4 : f32 to vector<16x24xf32>
    %8 = arith.mulf %7, %6 : vector<16x24xf32>
    %c0_12 = arith.constant 0 : index
    %c1 = arith.constant 1 : index
    %9 = memref.load %arg4[%c0_12, %c1] : memref<3x4xf32, #tpu.memory_space<smem>>
    %c1_13 = arith.constant 1 : index
    %c0_14 = arith.constant 0 : index
    %c0_15 = arith.constant 0 : index
    %10 = vector.load %arg5[%c1_13, %c0_14, %c0_15] : memref<4x16x24xf32, #tpu.memory_space<vmem>>, vector<1x16x24xf32>
    %11 = vector.shape_cast %10 : vector<1x16x24xf32> to vector<16x24xf32>
    %12 = vector.broadcast %9 : f32 to vector<16x24xf32>
    %13 = arith.mulf %12, %11 : vector<16x24xf32>
    %14 = arith.addf %8, %13 : vector<16x24xf32>
    %c0_16 = arith.constant 0 : index
    %c2 = arith.constant 2 : index
    %15 = memref.load %arg4[%c0_16, %c2] : memref<3x4xf32, #tpu.memory_space<smem>>
    %c2_17 = arith.constant 2 : index
    %c0_18 = arith.constant 0 : index
    %c0_19 = arith.constant 0 : index
    %16 = vector.load %arg5[%c2_17, %c0_18, %c0_19] : memref<4x16x24xf32, #tpu.memory_space<vmem>>, vector<1x16x24xf32>
    %17 = vector.shape_cast %16 : vector<1x16x24xf32> to vector<16x24xf32>
    %18 = vector.broadcast %15 : f32 to vector<16x24xf32>
    %19 = arith.mulf %18, %17 : vector<16x24xf32>
    %20 = arith.addf %14, %19 : vector<16x24xf32>
    %c0_20 = arith.constant 0 : index
    %c3 = arith.constant 3 : index
    %21 = memref.load %arg4[%c0_20, %c3] : memref<3x4xf32, #tpu.memory_space<smem>>
    %c3_21 = arith.constant 3 : index
    %c0_22 = arith.constant 0 : index
    %c0_23 = arith.constant 0 : index
    %22 = vector.load %arg5[%c3_21, %c0_22, %c0_23] : memref<4x16x24xf32, #tpu.memory_space<vmem>>, vector<1x16x24xf32>
    %23 = vector.shape_cast %22 : vector<1x16x24xf32> to vector<16x24xf32>
    %24 = vector.broadcast %21 : f32 to vector<16x24xf32>
    %25 = arith.mulf %24, %23 : vector<16x24xf32>
    %26 = arith.addf %20, %25 : vector<16x24xf32>
    %c1_24 = arith.constant 1 : index
    %c0_25 = arith.constant 0 : index
    %27 = memref.load %arg4[%c1_24, %c0_25] : memref<3x4xf32, #tpu.memory_space<smem>>
    %c0_26 = arith.constant 0 : index
    %c0_27 = arith.constant 0 : index
    %c0_28 = arith.constant 0 : index
    %28 = vector.load %arg5[%c0_26, %c0_27, %c0_28] : memref<4x16x24xf32, #tpu.memory_space<vmem>>, vector<1x16x24xf32>
    %29 = vector.shape_cast %28 : vector<1x16x24xf32> to vector<16x24xf32>
    %30 = vector.broadcast %27 : f32 to vector<16x24xf32>
    %31 = arith.mulf %30, %29 : vector<16x24xf32>
    %c1_29 = arith.constant 1 : index
    %c1_30 = arith.constant 1 : index
    %32 = memref.load %arg4[%c1_29, %c1_30] : memref<3x4xf32, #tpu.memory_space<smem>>
    %c1_31 = arith.constant 1 : index
    %c0_32 = arith.constant 0 : index
    %c0_33 = arith.constant 0 : index
    %33 = vector.load %arg5[%c1_31, %c0_32, %c0_33] : memref<4x16x24xf32, #tpu.memory_space<vmem>>, vector<1x16x24xf32>
    %34 = vector.shape_cast %33 : vector<1x16x24xf32> to vector<16x24xf32>
    %35 = vector.broadcast %32 : f32 to vector<16x24xf32>
    %36 = arith.mulf %35, %34 : vector<16x24xf32>
    %37 = arith.addf %31, %36 : vector<16x24xf32>
    %c1_34 = arith.constant 1 : index
    %c2_35 = arith.constant 2 : index
    %38 = memref.load %arg4[%c1_34, %c2_35] : memref<3x4xf32, #tpu.memory_space<smem>>
    %c2_36 = arith.constant 2 : index
    %c0_37 = arith.constant 0 : index
    %c0_38 = arith.constant 0 : index
    %39 = vector.load %arg5[%c2_36, %c0_37, %c0_38] : memref<4x16x24xf32, #tpu.memory_space<vmem>>, vector<1x16x24xf32>
    %40 = vector.shape_cast %39 : vector<1x16x24xf32> to vector<16x24xf32>
    %41 = vector.broadcast %38 : f32 to vector<16x24xf32>
    %42 = arith.mulf %41, %40 : vector<16x24xf32>
    %43 = arith.addf %37, %42 : vector<16x24xf32>
    %c1_39 = arith.constant 1 : index
    %c3_40 = arith.constant 3 : index
    %44 = memref.load %arg4[%c1_39, %c3_40] : memref<3x4xf32, #tpu.memory_space<smem>>
    %c3_41 = arith.constant 3 : index
    %c0_42 = arith.constant 0 : index
    %c0_43 = arith.constant 0 : index
    %45 = vector.load %arg5[%c3_41, %c0_42, %c0_43] : memref<4x16x24xf32, #tpu.memory_space<vmem>>, vector<1x16x24xf32>
    %46 = vector.shape_cast %45 : vector<1x16x24xf32> to vector<16x24xf32>
    %47 = vector.broadcast %44 : f32 to vector<16x24xf32>
    %48 = arith.mulf %47, %46 : vector<16x24xf32>
    %49 = arith.addf %43, %48 : vector<16x24xf32>
    %c2_44 = arith.constant 2 : index
    %c0_45 = arith.constant 0 : index
    %50 = memref.load %arg4[%c2_44, %c0_45] : memref<3x4xf32, #tpu.memory_space<smem>>
    %c0_46 = arith.constant 0 : index
    %c0_47 = arith.constant 0 : index
    %c0_48 = arith.constant 0 : index
    %51 = vector.load %arg5[%c0_46, %c0_47, %c0_48] : memref<4x16x24xf32, #tpu.memory_space<vmem>>, vector<1x16x24xf32>
    %52 = vector.shape_cast %51 : vector<1x16x24xf32> to vector<16x24xf32>
    %53 = vector.broadcast %50 : f32 to vector<16x24xf32>
    %54 = arith.mulf %53, %52 : vector<16x24xf32>
    %c2_49 = arith.constant 2 : index
    %c1_50 = arith.constant 1 : index
    %55 = memref.load %arg4[%c2_49, %c1_50] : memref<3x4xf32, #tpu.memory_space<smem>>
    %c1_51 = arith.constant 1 : index
    %c0_52 = arith.constant 0 : index
    %c0_53 = arith.constant 0 : index
    %56 = vector.load %arg5[%c1_51, %c0_52, %c0_53] : memref<4x16x24xf32, #tpu.memory_space<vmem>>, vector<1x16x24xf32>
    %57 = vector.shape_cast %56 : vector<1x16x24xf32> to vector<16x24xf32>
    %58 = vector.broadcast %55 : f32 to vector<16x24xf32>
    %59 = arith.mulf %58, %57 : vector<16x24xf32>
    %60 = arith.addf %54, %59 : vector<16x24xf32>
    %c2_54 = arith.constant 2 : index
    %c2_55 = arith.constant 2 : index
    %61 = memref.load %arg4[%c2_54, %c2_55] : memref<3x4xf32, #tpu.memory_space<smem>>
    %c2_56 = arith.constant 2 : index
    %c0_57 = arith.constant 0 : index
    %c0_58 = arith.constant 0 : index
    %62 = vector.load %arg5[%c2_56, %c0_57, %c0_58] : memref<4x16x24xf32, #tpu.memory_space<vmem>>, vector<1x16x24xf32>
    %63 = vector.shape_cast %62 : vector<1x16x24xf32> to vector<16x24xf32>
    %64 = vector.broadcast %61 : f32 to vector<16x24xf32>
    %65 = arith.mulf %64, %63 : vector<16x24xf32>
    %66 = arith.addf %60, %65 : vector<16x24xf32>
    %c2_59 = arith.constant 2 : index
    %c3_60 = arith.constant 3 : index
    %67 = memref.load %arg4[%c2_59, %c3_60] : memref<3x4xf32, #tpu.memory_space<smem>>
    %c3_61 = arith.constant 3 : index
    %c0_62 = arith.constant 0 : index
    %c0_63 = arith.constant 0 : index
    %68 = vector.load %arg5[%c3_61, %c0_62, %c0_63] : memref<4x16x24xf32, #tpu.memory_space<vmem>>, vector<1x16x24xf32>
    %69 = vector.shape_cast %68 : vector<1x16x24xf32> to vector<16x24xf32>
    %70 = vector.broadcast %67 : f32 to vector<16x24xf32>
    %71 = arith.mulf %70, %69 : vector<16x24xf32>
    %72 = arith.addf %66, %71 : vector<16x24xf32>
    %cst = arith.constant dense<0.000000e+00> : vector<8x24xf32>
    %73 = tpu.matmul %0, %26, %cst {dimension_numbers = #tpu.dot_dimension_numbers<[1], [0], [0], [1], [0, 0, 1, 1], [], []>} : vector<8x16xf32>, vector<16x24xf32>, vector<8x24xf32> -> vector<8x24xf32>
    %cst_64 = arith.constant dense<0.000000e+00> : vector<8x24xf32>
    %74 = tpu.matmul %0, %49, %cst_64 {dimension_numbers = #tpu.dot_dimension_numbers<[1], [0], [0], [1], [0, 0, 1, 1], [], []>} : vector<8x16xf32>, vector<16x24xf32>, vector<8x24xf32> -> vector<8x24xf32>
    %cst_65 = arith.constant dense<0.000000e+00> : vector<8x24xf32>
    %75 = tpu.matmul %0, %72, %cst_65 {dimension_numbers = #tpu.dot_dimension_numbers<[1], [0], [0], [1], [0, 0, 1, 1], [], []>} : vector<8x16xf32>, vector<16x24xf32>, vector<8x24xf32> -> vector<8x24xf32>
    %76 = tpu.concatenate %73, %74, %75 in 0 : vector<8x24xf32>, vector<8x24xf32>, vector<8x24xf32> -> vector<24x24xf32>
    %cst_66 = arith.constant dense<0.000000e+00> : vector<8x24xf32>
    %77 = tpu.matmul %2, %76, %cst_66 {dimension_numbers = #tpu.dot_dimension_numbers<[1], [0], [0], [1], [0, 0, 1, 1], [], []>} : vector<8x24xf32>, vector<24x24xf32>, vector<8x24xf32> -> vector<8x24xf32>
    %cst_67 = arith.constant 0.000000e+00 : f32
    %78 = vector.broadcast %cst_67 : f32 to vector<8x24xf32>
    %79 = arith.cmpf ogt, %77, %78 : vector<8x24xf32>
    %cst_68 = arith.constant 1.000000e-01 : f32
    %80 = vector.broadcast %cst_68 : f32 to vector<8x24xf32>
    %81 = arith.mulf %80, %77 : vector<8x24xf32>
    %82 = arith.select %79, %77, %81 : vector<8x24xi1>, vector<8x24xf32>
    %cst_69 = arith.constant dense<0.000000e+00> : vector<8x24xf32>
    %83 = tpu.matmul %1, %26, %cst_69 {dimension_numbers = #tpu.dot_dimension_numbers<[1], [0], [0], [1], [0, 0, 1, 1], [], []>} : vector<8x16xf32>, vector<16x24xf32>, vector<8x24xf32> -> vector<8x24xf32>
    %cst_70 = arith.constant dense<0.000000e+00> : vector<8x24xf32>
    %84 = tpu.matmul %1, %49, %cst_70 {dimension_numbers = #tpu.dot_dimension_numbers<[1], [0], [0], [1], [0, 0, 1, 1], [], []>} : vector<8x16xf32>, vector<16x24xf32>, vector<8x24xf32> -> vector<8x24xf32>
    %cst_71 = arith.constant dense<0.000000e+00> : vector<8x24xf32>
    %85 = tpu.matmul %1, %72, %cst_71 {dimension_numbers = #tpu.dot_dimension_numbers<[1], [0], [0], [1], [0, 0, 1, 1], [], []>} : vector<8x16xf32>, vector<16x24xf32>, vector<8x24xf32> -> vector<8x24xf32>
    %86 = tpu.concatenate %83, %84, %85 in 0 : vector<8x24xf32>, vector<8x24xf32>, vector<8x24xf32> -> vector<24x24xf32>
    %cst_72 = arith.constant dense<0.000000e+00> : vector<8x24xf32>
    %87 = tpu.matmul %3, %86, %cst_72 {dimension_numbers = #tpu.dot_dimension_numbers<[1], [0], [0], [1], [0, 0, 1, 1], [], []>} : vector<8x24xf32>, vector<24x24xf32>, vector<8x24xf32> -> vector<8x24xf32>
    %cst_73 = arith.constant 0.000000e+00 : f32
    %88 = vector.broadcast %cst_73 : f32 to vector<8x24xf32>
    %89 = arith.cmpf ogt, %87, %88 : vector<8x24xf32>
    %cst_74 = arith.constant 1.000000e-01 : f32
    %90 = vector.broadcast %cst_74 : f32 to vector<8x24xf32>
    %91 = arith.mulf %90, %87 : vector<8x24xf32>
    %92 = arith.select %89, %87, %91 : vector<8x24xi1>, vector<8x24xf32>
    %c0_75 = arith.constant 0 : index
    %c0_76 = arith.constant 0 : index
    %93 = vector.load %arg6[%c0_75, %c0_76] : memref<24x16xf32, #tpu.memory_space<vmem>>, vector<24x16xf32>
    %cst_77 = arith.constant dense<0.000000e+00> : vector<8x16xf32>
    %94 = tpu.matmul %92, %93, %cst_77 {dimension_numbers = #tpu.dot_dimension_numbers<[1], [0], [0], [1], [0, 0, 1, 1], [], []>} : vector<8x24xf32>, vector<24x16xf32>, vector<8x16xf32> -> vector<8x16xf32>
    %c0_78 = arith.constant 0 : index
    %c0_79 = arith.constant 0 : index
    %95 = vector.load %arg7[%c0_78, %c0_79] : memref<1x16xf32, #tpu.memory_space<vmem>>, vector<1x16xf32>
    %96 = vector.broadcast %95 : vector<1x16xf32> to vector<8x16xf32>
    %97 = arith.addf %94, %96 : vector<8x16xf32>
    %c0_80 = arith.constant 0 : index
    %c0_81 = arith.constant 0 : index
    %98 = vector.load %arg8[%c0_80, %c0_81] : memref<24x16xf32, #tpu.memory_space<vmem>>, vector<24x16xf32>
    %cst_82 = arith.constant dense<0.000000e+00> : vector<8x16xf32>
    %99 = tpu.matmul %82, %98, %cst_82 {dimension_numbers = #tpu.dot_dimension_numbers<[1], [0], [0], [1], [0, 0, 1, 1], [], []>} : vector<8x24xf32>, vector<24x16xf32>, vector<8x16xf32> -> vector<8x16xf32>
    %c0_83 = arith.constant 0 : index
    %c0_84 = arith.constant 0 : index
    %100 = vector.load %arg9[%c0_83, %c0_84] : memref<1x16xf32, #tpu.memory_space<vmem>>, vector<1x16xf32>
    %101 = vector.broadcast %100 : vector<1x16xf32> to vector<8x16xf32>
    %102 = arith.addf %99, %101 : vector<8x16xf32>
    %c0_85 = arith.constant 0 : index
    %c0_86 = arith.constant 0 : index
    %103 = memref.load %arg10[%c0_85, %c0_86] : memref<3x4xf32, #tpu.memory_space<smem>>
    %c0_87 = arith.constant 0 : index
    %c0_88 = arith.constant 0 : index
    %c0_89 = arith.constant 0 : index
    %104 = vector.load %arg11[%c0_87, %c0_88, %c0_89] : memref<4x16x16xf32, #tpu.memory_space<vmem>>, vector<1x16x16xf32>
    %105 = vector.shape_cast %104 : vector<1x16x16xf32> to vector<16x16xf32>
    %106 = vector.broadcast %103 : f32 to vector<16x16xf32>
    %107 = arith.mulf %106, %105 : vector<16x16xf32>
    %c0_90 = arith.constant 0 : index
    %c1_91 = arith.constant 1 : index
    %108 = memref.load %arg10[%c0_90, %c1_91] : memref<3x4xf32, #tpu.memory_space<smem>>
    %c1_92 = arith.constant 1 : index
    %c0_93 = arith.constant 0 : index
    %c0_94 = arith.constant 0 : index
    %109 = vector.load %arg11[%c1_92, %c0_93, %c0_94] : memref<4x16x16xf32, #tpu.memory_space<vmem>>, vector<1x16x16xf32>
    %110 = vector.shape_cast %109 : vector<1x16x16xf32> to vector<16x16xf32>
    %111 = vector.broadcast %108 : f32 to vector<16x16xf32>
    %112 = arith.mulf %111, %110 : vector<16x16xf32>
    %113 = arith.addf %107, %112 : vector<16x16xf32>
    %c0_95 = arith.constant 0 : index
    %c2_96 = arith.constant 2 : index
    %114 = memref.load %arg10[%c0_95, %c2_96] : memref<3x4xf32, #tpu.memory_space<smem>>
    %c2_97 = arith.constant 2 : index
    %c0_98 = arith.constant 0 : index
    %c0_99 = arith.constant 0 : index
    %115 = vector.load %arg11[%c2_97, %c0_98, %c0_99] : memref<4x16x16xf32, #tpu.memory_space<vmem>>, vector<1x16x16xf32>
    %116 = vector.shape_cast %115 : vector<1x16x16xf32> to vector<16x16xf32>
    %117 = vector.broadcast %114 : f32 to vector<16x16xf32>
    %118 = arith.mulf %117, %116 : vector<16x16xf32>
    %119 = arith.addf %113, %118 : vector<16x16xf32>
    %c0_100 = arith.constant 0 : index
    %c3_101 = arith.constant 3 : index
    %120 = memref.load %arg10[%c0_100, %c3_101] : memref<3x4xf32, #tpu.memory_space<smem>>
    %c3_102 = arith.constant 3 : index
    %c0_103 = arith.constant 0 : index
    %c0_104 = arith.constant 0 : index
    %121 = vector.load %arg11[%c3_102, %c0_103, %c0_104] : memref<4x16x16xf32, #tpu.memory_space<vmem>>, vector<1x16x16xf32>
    %122 = vector.shape_cast %121 : vector<1x16x16xf32> to vector<16x16xf32>
    %123 = vector.broadcast %120 : f32 to vector<16x16xf32>
    %124 = arith.mulf %123, %122 : vector<16x16xf32>
    %125 = arith.addf %119, %124 : vector<16x16xf32>
    %c1_105 = arith.constant 1 : index
    %c0_106 = arith.constant 0 : index
    %126 = memref.load %arg10[%c1_105, %c0_106] : memref<3x4xf32, #tpu.memory_space<smem>>
    %c0_107 = arith.constant 0 : index
    %c0_108 = arith.constant 0 : index
    %c0_109 = arith.constant 0 : index
    %127 = vector.load %arg11[%c0_107, %c0_108, %c0_109] : memref<4x16x16xf32, #tpu.memory_space<vmem>>, vector<1x16x16xf32>
    %128 = vector.shape_cast %127 : vector<1x16x16xf32> to vector<16x16xf32>
    %129 = vector.broadcast %126 : f32 to vector<16x16xf32>
    %130 = arith.mulf %129, %128 : vector<16x16xf32>
    %c1_110 = arith.constant 1 : index
    %c1_111 = arith.constant 1 : index
    %131 = memref.load %arg10[%c1_110, %c1_111] : memref<3x4xf32, #tpu.memory_space<smem>>
    %c1_112 = arith.constant 1 : index
    %c0_113 = arith.constant 0 : index
    %c0_114 = arith.constant 0 : index
    %132 = vector.load %arg11[%c1_112, %c0_113, %c0_114] : memref<4x16x16xf32, #tpu.memory_space<vmem>>, vector<1x16x16xf32>
    %133 = vector.shape_cast %132 : vector<1x16x16xf32> to vector<16x16xf32>
    %134 = vector.broadcast %131 : f32 to vector<16x16xf32>
    %135 = arith.mulf %134, %133 : vector<16x16xf32>
    %136 = arith.addf %130, %135 : vector<16x16xf32>
    %c1_115 = arith.constant 1 : index
    %c2_116 = arith.constant 2 : index
    %137 = memref.load %arg10[%c1_115, %c2_116] : memref<3x4xf32, #tpu.memory_space<smem>>
    %c2_117 = arith.constant 2 : index
    %c0_118 = arith.constant 0 : index
    %c0_119 = arith.constant 0 : index
    %138 = vector.load %arg11[%c2_117, %c0_118, %c0_119] : memref<4x16x16xf32, #tpu.memory_space<vmem>>, vector<1x16x16xf32>
    %139 = vector.shape_cast %138 : vector<1x16x16xf32> to vector<16x16xf32>
    %140 = vector.broadcast %137 : f32 to vector<16x16xf32>
    %141 = arith.mulf %140, %139 : vector<16x16xf32>
    %142 = arith.addf %136, %141 : vector<16x16xf32>
    %c1_120 = arith.constant 1 : index
    %c3_121 = arith.constant 3 : index
    %143 = memref.load %arg10[%c1_120, %c3_121] : memref<3x4xf32, #tpu.memory_space<smem>>
    %c3_122 = arith.constant 3 : index
    %c0_123 = arith.constant 0 : index
    %c0_124 = arith.constant 0 : index
    %144 = vector.load %arg11[%c3_122, %c0_123, %c0_124] : memref<4x16x16xf32, #tpu.memory_space<vmem>>, vector<1x16x16xf32>
    %145 = vector.shape_cast %144 : vector<1x16x16xf32> to vector<16x16xf32>
    %146 = vector.broadcast %143 : f32 to vector<16x16xf32>
    %147 = arith.mulf %146, %145 : vector<16x16xf32>
    %148 = arith.addf %142, %147 : vector<16x16xf32>
    %c2_125 = arith.constant 2 : index
    %c0_126 = arith.constant 0 : index
    %149 = memref.load %arg10[%c2_125, %c0_126] : memref<3x4xf32, #tpu.memory_space<smem>>
    %c0_127 = arith.constant 0 : index
    %c0_128 = arith.constant 0 : index
    %c0_129 = arith.constant 0 : index
    %150 = vector.load %arg11[%c0_127, %c0_128, %c0_129] : memref<4x16x16xf32, #tpu.memory_space<vmem>>, vector<1x16x16xf32>
    %151 = vector.shape_cast %150 : vector<1x16x16xf32> to vector<16x16xf32>
    %152 = vector.broadcast %149 : f32 to vector<16x16xf32>
    %153 = arith.mulf %152, %151 : vector<16x16xf32>
    %c2_130 = arith.constant 2 : index
    %c1_131 = arith.constant 1 : index
    %154 = memref.load %arg10[%c2_130, %c1_131] : memref<3x4xf32, #tpu.memory_space<smem>>
    %c1_132 = arith.constant 1 : index
    %c0_133 = arith.constant 0 : index
    %c0_134 = arith.constant 0 : index
    %155 = vector.load %arg11[%c1_132, %c0_133, %c0_134] : memref<4x16x16xf32, #tpu.memory_space<vmem>>, vector<1x16x16xf32>
    %156 = vector.shape_cast %155 : vector<1x16x16xf32> to vector<16x16xf32>
    %157 = vector.broadcast %154 : f32 to vector<16x16xf32>
    %158 = arith.mulf %157, %156 : vector<16x16xf32>
    %159 = arith.addf %153, %158 : vector<16x16xf32>
    %c2_135 = arith.constant 2 : index
    %c2_136 = arith.constant 2 : index
    %160 = memref.load %arg10[%c2_135, %c2_136] : memref<3x4xf32, #tpu.memory_space<smem>>
    %c2_137 = arith.constant 2 : index
    %c0_138 = arith.constant 0 : index
    %c0_139 = arith.constant 0 : index
    %161 = vector.load %arg11[%c2_137, %c0_138, %c0_139] : memref<4x16x16xf32, #tpu.memory_space<vmem>>, vector<1x16x16xf32>
    %162 = vector.shape_cast %161 : vector<1x16x16xf32> to vector<16x16xf32>
    %163 = vector.broadcast %160 : f32 to vector<16x16xf32>
    %164 = arith.mulf %163, %162 : vector<16x16xf32>
    %165 = arith.addf %159, %164 : vector<16x16xf32>
    %c2_140 = arith.constant 2 : index
    %c3_141 = arith.constant 3 : index
    %166 = memref.load %arg10[%c2_140, %c3_141] : memref<3x4xf32, #tpu.memory_space<smem>>
    %c3_142 = arith.constant 3 : index
    %c0_143 = arith.constant 0 : index
    %c0_144 = arith.constant 0 : index
    %167 = vector.load %arg11[%c3_142, %c0_143, %c0_144] : memref<4x16x16xf32, #tpu.memory_space<vmem>>, vector<1x16x16xf32>
    %168 = vector.shape_cast %167 : vector<1x16x16xf32> to vector<16x16xf32>
    %169 = vector.broadcast %166 : f32 to vector<16x16xf32>
    %170 = arith.mulf %169, %168 : vector<16x16xf32>
    %171 = arith.addf %165, %170 : vector<16x16xf32>
    %cst_145 = arith.constant dense<0.000000e+00> : vector<8x16xf32>
    %172 = tpu.matmul %97, %125, %cst_145 {dimension_numbers = #tpu.dot_dimension_numbers<[1], [0], [0], [1], [0, 0, 1, 1], [], []>} : vector<8x16xf32>, vector<16x16xf32>, vector<8x16xf32> -> vector<8x16xf32>
    %cst_146 = arith.constant dense<0.000000e+00> : vector<8x16xf32>
    %173 = tpu.matmul %97, %148, %cst_146 {dimension_numbers = #tpu.dot_dimension_numbers<[1], [0], [0], [1], [0, 0, 1, 1], [], []>} : vector<8x16xf32>, vector<16x16xf32>, vector<8x16xf32> -> vector<8x16xf32>
    %cst_147 = arith.constant dense<0.000000e+00> : vector<8x16xf32>
    %174 = tpu.matmul %97, %171, %cst_147 {dimension_numbers = #tpu.dot_dimension_numbers<[1], [0], [0], [1], [0, 0, 1, 1], [], []>} : vector<8x16xf32>, vector<16x16xf32>, vector<8x16xf32> -> vector<8x16xf32>
    %175 = tpu.concatenate %172, %173, %174 in 0 : vector<8x16xf32>, vector<8x16xf32>, vector<8x16xf32> -> vector<24x16xf32>
    %cst_148 = arith.constant dense<0.000000e+00> : vector<8x16xf32>
    %176 = tpu.matmul %2, %175, %cst_148 {dimension_numbers = #tpu.dot_dimension_numbers<[1], [0], [0], [1], [0, 0, 1, 1], [], []>} : vector<8x24xf32>, vector<24x16xf32>, vector<8x16xf32> -> vector<8x16xf32>
    %cst_149 = arith.constant 0.000000e+00 : f32
    %177 = vector.broadcast %cst_149 : f32 to vector<8x16xf32>
    %178 = arith.cmpf ogt, %176, %177 : vector<8x16xf32>
    %cst_150 = arith.constant 1.000000e-01 : f32
    %179 = vector.broadcast %cst_150 : f32 to vector<8x16xf32>
    %180 = arith.mulf %179, %176 : vector<8x16xf32>
    %181 = arith.select %178, %176, %180 : vector<8x16xi1>, vector<8x16xf32>
    %cst_151 = arith.constant dense<0.000000e+00> : vector<8x16xf32>
    %182 = tpu.matmul %102, %125, %cst_151 {dimension_numbers = #tpu.dot_dimension_numbers<[1], [0], [0], [1], [0, 0, 1, 1], [], []>} : vector<8x16xf32>, vector<16x16xf32>, vector<8x16xf32> -> vector<8x16xf32>
    %cst_152 = arith.constant dense<0.000000e+00> : vector<8x16xf32>
    %183 = tpu.matmul %102, %148, %cst_152 {dimension_numbers = #tpu.dot_dimension_numbers<[1], [0], [0], [1], [0, 0, 1, 1], [], []>} : vector<8x16xf32>, vector<16x16xf32>, vector<8x16xf32> -> vector<8x16xf32>
    %cst_153 = arith.constant dense<0.000000e+00> : vector<8x16xf32>
    %184 = tpu.matmul %102, %171, %cst_153 {dimension_numbers = #tpu.dot_dimension_numbers<[1], [0], [0], [1], [0, 0, 1, 1], [], []>} : vector<8x16xf32>, vector<16x16xf32>, vector<8x16xf32> -> vector<8x16xf32>
    %185 = tpu.concatenate %182, %183, %184 in 0 : vector<8x16xf32>, vector<8x16xf32>, vector<8x16xf32> -> vector<24x16xf32>
    %cst_154 = arith.constant dense<0.000000e+00> : vector<8x16xf32>
    %186 = tpu.matmul %3, %185, %cst_154 {dimension_numbers = #tpu.dot_dimension_numbers<[1], [0], [0], [1], [0, 0, 1, 1], [], []>} : vector<8x24xf32>, vector<24x16xf32>, vector<8x16xf32> -> vector<8x16xf32>
    %cst_155 = arith.constant 0.000000e+00 : f32
    %187 = vector.broadcast %cst_155 : f32 to vector<8x16xf32>
    %188 = arith.cmpf ogt, %186, %187 : vector<8x16xf32>
    %cst_156 = arith.constant 1.000000e-01 : f32
    %189 = vector.broadcast %cst_156 : f32 to vector<8x16xf32>
    %190 = arith.mulf %189, %186 : vector<8x16xf32>
    %191 = arith.select %188, %186, %190 : vector<8x16xi1>, vector<8x16xf32>
    %c0_157 = arith.constant 0 : index
    %c0_158 = arith.constant 0 : index
    %192 = vector.load %arg12[%c0_157, %c0_158] : memref<16x16xf32, #tpu.memory_space<vmem>>, vector<16x16xf32>
    %cst_159 = arith.constant dense<0.000000e+00> : vector<8x16xf32>
    %193 = tpu.matmul %191, %192, %cst_159 {dimension_numbers = #tpu.dot_dimension_numbers<[1], [0], [0], [1], [0, 0, 1, 1], [], []>} : vector<8x16xf32>, vector<16x16xf32>, vector<8x16xf32> -> vector<8x16xf32>
    %c0_160 = arith.constant 0 : index
    %c0_161 = arith.constant 0 : index
    %194 = vector.load %arg13[%c0_160, %c0_161] : memref<1x16xf32, #tpu.memory_space<vmem>>, vector<1x16xf32>
    %195 = vector.broadcast %194 : vector<1x16xf32> to vector<8x16xf32>
    %196 = arith.addf %193, %195 : vector<8x16xf32>
    %c0_162 = arith.constant 0 : index
    %c0_163 = arith.constant 0 : index
    %197 = vector.load %arg14[%c0_162, %c0_163] : memref<16x16xf32, #tpu.memory_space<vmem>>, vector<16x16xf32>
    %cst_164 = arith.constant dense<0.000000e+00> : vector<8x16xf32>
    %198 = tpu.matmul %181, %197, %cst_164 {dimension_numbers = #tpu.dot_dimension_numbers<[1], [0], [0], [1], [0, 0, 1, 1], [], []>} : vector<8x16xf32>, vector<16x16xf32>, vector<8x16xf32> -> vector<8x16xf32>
    %c0_165 = arith.constant 0 : index
    %c0_166 = arith.constant 0 : index
    %199 = vector.load %arg15[%c0_165, %c0_166] : memref<1x16xf32, #tpu.memory_space<vmem>>, vector<1x16xf32>
    %200 = vector.broadcast %199 : vector<1x16xf32> to vector<8x16xf32>
    %201 = arith.addf %198, %200 : vector<8x16xf32>
    %cst_167 = arith.constant 5.000000e-01 : f32
    %202 = vector.broadcast %cst_167 : f32 to vector<8x16xf32>
    %203 = arith.mulf %196, %202 : vector<8x16xf32>
    %204 = arith.addf %97, %203 : vector<8x16xf32>
    %cst_168 = arith.constant 5.000000e-01 : f32
    %205 = vector.broadcast %cst_168 : f32 to vector<8x16xf32>
    %206 = arith.mulf %201, %205 : vector<8x16xf32>
    %207 = arith.addf %102, %206 : vector<8x16xf32>
    %c0_169 = arith.constant 0 : index
    %c0_170 = arith.constant 0 : index
    %208 = vector.load %arg21[%c0_169, %c0_170] : memref<8x16xf32, #tpu.memory_space<vmem>>, vector<8x16xf32>
    tpu.vector_store %arg21[%c0_169, %c0_170], %204 {strides = array<i32>} : memref<8x16xf32, #tpu.memory_space<vmem>>, vector<8x16xf32>,
    %c0_171 = arith.constant 0 : index
    %c0_172 = arith.constant 0 : index
    %209 = vector.load %arg22[%c0_171, %c0_172] : memref<8x16xf32, #tpu.memory_space<vmem>>, vector<8x16xf32>
    tpu.vector_store %arg22[%c0_171, %c0_172], %207 {strides = array<i32>} : memref<8x16xf32, #tpu.memory_space<vmem>>, vector<8x16xf32>,
    %c0_173 = arith.constant 0 : index
    %c0_174 = arith.constant 0 : index
    %210 = vector.load %arg18[%c0_173, %c0_174] : memref<8x8xf32, #tpu.memory_space<vmem>>, vector<8x8xf32>
    %cst_175 = arith.constant dense<0.000000e+00> : vector<8x16xf32>
    %211 = tpu.matmul %210, %204, %cst_175 {dimension_numbers = #tpu.dot_dimension_numbers<[1], [0], [0], [1], [0, 0, 1, 1], [], []>} : vector<8x8xf32>, vector<8x16xf32>, vector<8x16xf32> -> vector<8x16xf32>
    %c0_176 = arith.constant 0 : index
    %c0_177 = arith.constant 0 : index
    %212 = vector.load %arg19[%c0_176, %c0_177] : memref<8x8xf32, #tpu.memory_space<vmem>>, vector<8x8xf32>
    %cst_178 = arith.constant dense<0.000000e+00> : vector<8x16xf32>
    %213 = tpu.matmul %212, %207, %cst_178 {dimension_numbers = #tpu.dot_dimension_numbers<[1], [0], [0], [1], [0, 0, 1, 1], [], []>} : vector<8x8xf32>, vector<8x16xf32>, vector<8x16xf32> -> vector<8x16xf32>
    %cst_179 = arith.constant 0.000000e+00 : f32
    %214 = vector.broadcast %cst_179 : f32 to vector<8x3xf32>
    %c0_180 = arith.constant 0 : index
    %c0_181 = arith.constant 0 : index
    %c0_182 = arith.constant 0 : index
    %215 = vector.load %arg16[%c0_180, %c0_181, %c0_182] : memref<2x16x16xf32, #tpu.memory_space<vmem>>, vector<1x16x16xf32>
    %216 = vector.shape_cast %215 : vector<1x16x16xf32> to vector<16x16xf32>
    %cst_183 = arith.constant dense<0.000000e+00> : vector<8x16xf32>
    %217 = tpu.matmul %211, %216, %cst_183 {dimension_numbers = #tpu.dot_dimension_numbers<[1], [0], [0], [1], [0, 0, 1, 1], [], []>} : vector<8x16xf32>, vector<16x16xf32>, vector<8x16xf32> -> vector<8x16xf32>
    %218 = arith.mulf %217, %213 : vector<8x16xf32>
    %cst_184 = arith.constant dense<0.000000e+00> : vector<8xf32>
    %219 = vector.multi_reduction <add>, %218, %cst_184 [1] : vector<8x16xf32> to vector<8xf32>
    %220 = vector.shape_cast %219 : vector<8xf32> to vector<8x1xf32>
    %c0_185 = arith.constant 0 : index
    %c0_186 = arith.constant 0 : index
    %221 = vector.load %arg17[%c0_185, %c0_186] : memref<2x3xf32, #tpu.memory_space<vmem>>, vector<1x3xf32>
    %222 = vector.broadcast %220 : vector<8x1xf32> to vector<8x3xf32>
    %223 = vector.broadcast %221 : vector<1x3xf32> to vector<8x3xf32>
    %224 = arith.mulf %222, %223 : vector<8x3xf32>
    %225 = arith.addf %214, %224 : vector<8x3xf32>
    %c1_187 = arith.constant 1 : index
    %c0_188 = arith.constant 0 : index
    %c0_189 = arith.constant 0 : index
    %226 = vector.load %arg16[%c1_187, %c0_188, %c0_189] : memref<2x16x16xf32, #tpu.memory_space<vmem>>, vector<1x16x16xf32>
    %227 = vector.shape_cast %226 : vector<1x16x16xf32> to vector<16x16xf32>
    %cst_190 = arith.constant dense<0.000000e+00> : vector<8x16xf32>
    %228 = tpu.matmul %211, %227, %cst_190 {dimension_numbers = #tpu.dot_dimension_numbers<[1], [0], [0], [1], [0, 0, 1, 1], [], []>} : vector<8x16xf32>, vector<16x16xf32>, vector<8x16xf32> -> vector<8x16xf32>
    %229 = arith.mulf %228, %213 : vector<8x16xf32>
    %cst_191 = arith.constant dense<0.000000e+00> : vector<8xf32>
    %230 = vector.multi_reduction <add>, %229, %cst_191 [1] : vector<8x16xf32> to vector<8xf32>
    %231 = vector.shape_cast %230 : vector<8xf32> to vector<8x1xf32>
    %c1_192 = arith.constant 1 : index
    %c0_193 = arith.constant 0 : index
    %232 = vector.load %arg17[%c1_192, %c0_193] : memref<2x3xf32, #tpu.memory_space<vmem>>, vector<1x3xf32>
    %233 = vector.broadcast %231 : vector<8x1xf32> to vector<8x3xf32>
    %234 = vector.broadcast %232 : vector<1x3xf32> to vector<8x3xf32>
    %235 = arith.mulf %233, %234 : vector<8x3xf32>
    %236 = arith.addf %225, %235 : vector<8x3xf32>
    %c0_194 = arith.constant 0 : index
    %c0_195 = arith.constant 0 : index
    %237 = vector.load %arg20[%c0_194, %c0_195] : memref<8x3xf32, #tpu.memory_space<vmem>>, vector<8x3xf32>
    tpu.vector_store %arg20[%c0_194, %c0_195], %236 {strides = array<i32>} : memref<8x3xf32, #tpu.memory_space<vmem>>, vector<8x3xf32>,
    %cst_196 = arith.constant 0.000000e+00 : f32
    %238 = vector.broadcast %cst_196 : f32 to vector<1x1xf32>
    %c0_197 = arith.constant 0 : index
    %c0_198 = arith.constant 0 : index
    %c0_199 = arith.constant 0 : index
    %239 = vector.load %arg23[%c0_197, %c0_198, %c0_199] : memref<3x16x24xf32, #tpu.memory_space<vmem>>, vector<1x16x24xf32>
    %240 = vector.shape_cast %239 : vector<1x16x24xf32> to vector<16x24xf32>
    %241 = vector.shape_cast %26 : vector<16x24xf32> to vector<1x16x24xf32>
    tpu.vector_store %arg23[%c0_197, %c0_198, %c0_199], %241 {strides = array<i32>} : memref<3x16x24xf32, #tpu.memory_space<vmem>>, vector<1x16x24xf32>,
    %c1_200 = arith.constant 1 : index
    %c0_201 = arith.constant 0 : index
    %c0_202 = arith.constant 0 : index
    %242 = vector.load %arg23[%c1_200, %c0_201, %c0_202] : memref<3x16x24xf32, #tpu.memory_space<vmem>>, vector<1x16x24xf32>
    %243 = vector.shape_cast %242 : vector<1x16x24xf32> to vector<16x24xf32>
    %244 = vector.shape_cast %49 : vector<16x24xf32> to vector<1x16x24xf32>
    tpu.vector_store %arg23[%c1_200, %c0_201, %c0_202], %244 {strides = array<i32>} : memref<3x16x24xf32, #tpu.memory_space<vmem>>, vector<1x16x24xf32>,
    %245 = arith.mulf %49, %26 : vector<16x24xf32>
    %cst_203 = arith.constant dense<0.000000e+00> : vector<16xf32>
    %246 = vector.multi_reduction <add>, %245, %cst_203 [1] : vector<16x24xf32> to vector<16xf32>
    %247 = vector.shape_cast %246 : vector<16xf32> to vector<16x1xf32>
    %248 = arith.mulf %49, %49 : vector<16x24xf32>
    %cst_204 = arith.constant dense<0.000000e+00> : vector<16xf32>
    %249 = vector.multi_reduction <add>, %248, %cst_204 [1] : vector<16x24xf32> to vector<16xf32>
    %250 = vector.shape_cast %249 : vector<16xf32> to vector<16x1xf32>
    %251 = arith.mulf %26, %26 : vector<16x24xf32>
    %cst_205 = arith.constant dense<0.000000e+00> : vector<16xf32>
    %252 = vector.multi_reduction <add>, %251, %cst_205 [1] : vector<16x24xf32> to vector<16xf32>
    %253 = vector.shape_cast %252 : vector<16xf32> to vector<16x1xf32>
    %cst_206 = arith.constant 1.000000e-16 : f32
    %254 = vector.broadcast %cst_206 : f32 to vector<16x1xf32>
    %255 = arith.maximumf %250, %254 : vector<16x1xf32>
    %256 = math.rsqrt %255 : vector<16x1xf32>
    %257 = arith.mulf %247, %256 : vector<16x1xf32>
    %cst_207 = arith.constant 1.000000e-16 : f32
    %258 = vector.broadcast %cst_207 : f32 to vector<16x1xf32>
    %259 = arith.maximumf %253, %258 : vector<16x1xf32>
    %260 = math.rsqrt %259 : vector<16x1xf32>
    %261 = arith.mulf %257, %260 : vector<16x1xf32>
    %cst_208 = arith.constant dense<0.000000e+00> : vector<1xf32>
    %262 = vector.multi_reduction <add>, %261, %cst_208 [0] : vector<16x1xf32> to vector<1xf32>
    %263 = vector.shape_cast %262 : vector<1xf32> to vector<1x1xf32>
    %264 = arith.subf %238, %263 : vector<1x1xf32>
    %c2_209 = arith.constant 2 : index
    %c0_210 = arith.constant 0 : index
    %c0_211 = arith.constant 0 : index
    %265 = vector.load %arg23[%c2_209, %c0_210, %c0_211] : memref<3x16x24xf32, #tpu.memory_space<vmem>>, vector<1x16x24xf32>
    %266 = vector.shape_cast %265 : vector<1x16x24xf32> to vector<16x24xf32>
    %267 = vector.shape_cast %72 : vector<16x24xf32> to vector<1x16x24xf32>
    tpu.vector_store %arg23[%c2_209, %c0_210, %c0_211], %267 {strides = array<i32>} : memref<3x16x24xf32, #tpu.memory_space<vmem>>, vector<1x16x24xf32>,
    %268 = arith.mulf %72, %49 : vector<16x24xf32>
    %cst_212 = arith.constant dense<0.000000e+00> : vector<16xf32>
    %269 = vector.multi_reduction <add>, %268, %cst_212 [1] : vector<16x24xf32> to vector<16xf32>
    %270 = vector.shape_cast %269 : vector<16xf32> to vector<16x1xf32>
    %271 = arith.mulf %72, %72 : vector<16x24xf32>
    %cst_213 = arith.constant dense<0.000000e+00> : vector<16xf32>
    %272 = vector.multi_reduction <add>, %271, %cst_213 [1] : vector<16x24xf32> to vector<16xf32>
    %273 = vector.shape_cast %272 : vector<16xf32> to vector<16x1xf32>
    %274 = arith.mulf %49, %49 : vector<16x24xf32>
    %cst_214 = arith.constant dense<0.000000e+00> : vector<16xf32>
    %275 = vector.multi_reduction <add>, %274, %cst_214 [1] : vector<16x24xf32> to vector<16xf32>
    %276 = vector.shape_cast %275 : vector<16xf32> to vector<16x1xf32>
    %cst_215 = arith.constant 1.000000e-16 : f32
    %277 = vector.broadcast %cst_215 : f32 to vector<16x1xf32>
    %278 = arith.maximumf %273, %277 : vector<16x1xf32>
    %279 = math.rsqrt %278 : vector<16x1xf32>
    %280 = arith.mulf %270, %279 : vector<16x1xf32>
    %cst_216 = arith.constant 1.000000e-16 : f32
    %281 = vector.broadcast %cst_216 : f32 to vector<16x1xf32>
    %282 = arith.maximumf %276, %281 : vector<16x1xf32>
    %283 = math.rsqrt %282 : vector<16x1xf32>
    %284 = arith.mulf %280, %283 : vector<16x1xf32>
    %cst_217 = arith.constant dense<0.000000e+00> : vector<1xf32>
    %285 = vector.multi_reduction <add>, %284, %cst_217 [0] : vector<16x1xf32> to vector<1xf32>
    %286 = vector.shape_cast %285 : vector<1xf32> to vector<1x1xf32>
    %287 = arith.subf %264, %286 : vector<1x1xf32>
    %c0_218 = arith.constant 0 : index
    %c0_219 = arith.constant 0 : index
    %288 = vector.load %arg24[%c0_218, %c0_219] : memref<1x1xf32, #tpu.memory_space<vmem>>, vector<1x1xf32>
    tpu.vector_store %arg24[%c0_218, %c0_219], %287 {strides = array<i32>} : memref<1x1xf32, #tpu.memory_space<vmem>>, vector<1x1xf32>,
    return
  }
}

</mosaic_0001>

<llo_original>
// kernel: net_forward.1
$region0: #{net_forward.1}
  #allocation0 [shape = 'u32[]', space=smem, size = 0x4, offset = 0x4, fixed_abs, tag = 'smem constant byte address 0x4 - core index']
  #allocation1 [shape = 'u32[144,128]{1,0:T(1,128)}', space=vmem, size = 0x12000, scoped, tag = 'internal scratch']
  %s0 = inlined_call_operand.vmem [shape: f32[8,16], index: 0, kind: input, shape index: {}]
  %s1 = inlined_call_operand.vmem [shape: f32[8,16], index: 1, kind: input, shape index: {}]
  %s2 = inlined_call_operand.vmem [shape: f32[8,24], index: 2, kind: input, shape index: {}]
  %s3 = inlined_call_operand.vmem [shape: f32[8,24], index: 3, kind: input, shape index: {}]
  %s4 = inlined_call_operand.vmem [shape: f32[3,4], index: 4, kind: input, shape index: {}]
  %s5 = inlined_call_operand.vmem [shape: f32[4,16,24], index: 5, kind: input, shape index: {}]
  %s6 = inlined_call_operand.vmem [shape: f32[24,16], index: 6, kind: input, shape index: {}]
  %s7 = inlined_call_operand.vmem [shape: f32[1,16], index: 7, kind: input, shape index: {}]
  %s8 = inlined_call_operand.vmem [shape: f32[24,16], index: 8, kind: input, shape index: {}]
  %s9 = inlined_call_operand.vmem [shape: f32[1,16], index: 9, kind: input, shape index: {}]
  %s10 = inlined_call_operand.vmem [shape: f32[3,4], index: 10, kind: input, shape index: {}]
  %s11 = inlined_call_operand.vmem [shape: f32[4,16,16], index: 11, kind: input, shape index: {}]
  %s12 = inlined_call_operand.vmem [shape: f32[16,16], index: 12, kind: input, shape index: {}]
  %s13 = inlined_call_operand.vmem [shape: f32[1,16], index: 13, kind: input, shape index: {}]
  %s14 = inlined_call_operand.vmem [shape: f32[16,16], index: 14, kind: input, shape index: {}]
  %s15 = inlined_call_operand.vmem [shape: f32[1,16], index: 15, kind: input, shape index: {}]
  %s16 = inlined_call_operand.vmem [shape: f32[2,16,16], index: 16, kind: input, shape index: {}]
  %s17 = inlined_call_operand.vmem [shape: f32[2,3], index: 17, kind: input, shape index: {}]
  %s18 = inlined_call_operand.vmem [shape: f32[8,8], index: 18, kind: input, shape index: {}]
  %s19 = inlined_call_operand.vmem [shape: f32[8,8], index: 19, kind: input, shape index: {}]
  %s20 = inlined_call_operand.vmem [shape: f32[8,3], index: 20, kind: output, shape index: {0}]
  %s21 = inlined_call_operand.hbm [shape: f32[8,16], index: 21, kind: output, shape index: {1}]
  %s22 = inlined_call_operand.hbm [shape: f32[8,16], index: 22, kind: output, shape index: {2}]
  %s23 = inlined_call_operand.hbm [shape: f32[3,16,24], index: 23, kind: output, shape index: {3}]
  %s24 = inlined_call_operand.hbm [shape: f32[1,1], index: 24, kind: output, shape index: {4}]
  %25 = xla_tuple %s20, %s21, %s22, %s23, %s24
  %s26 = sld [smem:[#allocation0]]
  $region130: #{net_forward.1} parent=0
    _
  %s28 = ssub.s32 1, %s26
  %s29 = scalar_select 0, %s28, %s26
  $region1: #{net_forward.1} parent=0
    #allocation2 [shape = 'u8[2048]{0}', space=smem, size = 0x800, scoped, tag = 'input window, operand 4, single buffered']
    #allocation3 [shape = 's32[1]{0}', space=sflag, size = 0x4, scoped, tag = 'scoped memory for net_forward.1']
    #allocation4 [shape = 's32[1]{0}', space=sflag, size = 0x4, scoped, tag = 'scoped memory for net_forward.1']
    #allocation5 [shape = 'u8[2048]{0}', space=smem, size = 0x800, scoped, tag = 'input window, operand 10, single buffered']
    #allocation6 [shape = 's32[1]{0}', space=sflag, size = 0x4, scoped, tag = 'scoped memory for net_forward.1']
    #allocation7 [shape = 'u8[4096]{0}', space=vmem, size = 0x1000, scoped, tag = 'output window, operand 1, single buffered']
    #allocation8 [shape = 'u8[4096]{0}', space=vmem, size = 0x1000, scoped, tag = 'output window, operand 2, single buffered']
    #allocation9 [shape = 's32[1]{0}', space=sflag, size = 0x4, scoped, tag = 'scoped memory for net_forward.1']
    #allocation10 [shape = 'u8[24576]{0}', space=vmem, size = 0x6000, scoped, tag = 'output window, operand 3, single buffered']
    #allocation11 [shape = 'u8[512]{0}', space=vmem, size = 0x400, scoped, tag = 'output window, operand 4, single buffered']
    #allocation12 [shape = 's32[1]{0}', space=sflag, size = 0x4, scoped, tag = 'scoped memory for net_forward.1']
    %30 = vsyncpa [#allocation4], 0
    %31 = vsyncpa [#allocation6], 0
    %32 = vsyncpa [#allocation3], 0
    %33 = vsyncpa [#allocation9], 0
    %34 = vsyncpa [#allocation12], 0
    // Predicated region
    $region2: #{net_forward.1} parent=1 // pred_check
      _
    $region3: #{net_forward.1} parent=1 // pred_check_branch
      %36 = sbr.rel (0) target = $region5
    $region4: #{net_forward.1} parent=1 // pred_region
      _
    $region5: #{net_forward.1} parent=1 // pred_fallthru
      _
    // Predicated region
    $region6: #{net_forward.1} parent=1 // pred_check
      _
    $region7: #{net_forward.1} parent=1 // pred_check_branch
      %38 = sbr.rel (0) target = $region9
    $region8: #{net_forward.1} parent=1 // pred_region
      _
    $region9: #{net_forward.1} parent=1 // pred_fallthru
      _
    // Predicated region
    $region10: #{net_forward.1} parent=1 // pred_check
      _
    $region11: #{net_forward.1} parent=1 // pred_check_branch
      %40 = sbr.rel (0) target = $region13
    $region12: #{net_forward.1} parent=1 // pred_region
      _
    $region13: #{net_forward.1} parent=1 // pred_fallthru
      _
    // Predicated region
    $region14: #{net_forward.1} parent=1 // pred_check
      _
    $region15: #{net_forward.1} parent=1 // pred_check_branch
      %42 = sbr.rel (0) target = $region17
    $region16: #{net_forward.1} parent=1 // pred_region
      _
    $region17: #{net_forward.1} parent=1 // pred_fallthru
      _
    // Predicated region
    $region18: #{net_forward.1} parent=1 // pred_check
      _
    $region19: #{net_forward.1} parent=1 // pred_check_branch
      %44 = sbr.rel (0) target = $region21
    $region20: #{net_forward.1} parent=1 // pred_region
      %s46 = ssub.s32 64, 64
      %47 = vsyncadd [#allocation4], %s46
      %s49 = sshll.u32 %s4, 4
      %s50 = int_to_ptr.vmem [resolvable:$true] %s49
      %52 = dma.vmem_to_smem %s50, 64, [#allocation2], [#allocation4]
    $region21: #{net_forward.1} parent=1 // pred_fallthru
      _
    // Predicated region
    $region22: #{net_forward.1} parent=1 // pred_check
      _
    $region23: #{net_forward.1} parent=1 // pred_check_branch
      %54 = sbr.rel (0) target = $region25
    $region24: #{net_forward.1} parent=1 // pred_region
      _
    $region25: #{net_forward.1} parent=1 // pred_fallthru
      _
    // Predicated region
    $region26: #{net_forward.1} parent=1 // pred_check
      _
    $region27: #{net_forward.1} parent=1 // pred_check_branch
      %56 = sbr.rel (0) target = $region29
    $region28: #{net_forward.1} parent=1 // pred_region
      _
    $region29: #{net_forward.1} parent=1 // pred_fallthru
      _
    // Predicated region
    $region30: #{net_forward.1} parent=1 // pred_check
      _
    $region31: #{net_forward.1} parent=1 // pred_check_branch
      %58 = sbr.rel (0) target = $region33
    $region32: #{net_forward.1} parent=1 // pred_region
      _
    $region33: #{net_forward.1} parent=1 // pred_fallthru
      _
    // Predicated region
    $region34: #{net_forward.1} parent=1 // pred_check
      _
    $region35: #{net_forward.1} parent=1 // pred_check_branch
      %60 = sbr.rel (0) target = $region37
    $region36: #{net_forward.1} parent=1 // pred_region
      _
    $region37: #{net_forward.1} parent=1 // pred_fallthru
      _
    // Predicated region
    $region38: #{net_forward.1} parent=1 // pred_check
      _
    $region39: #{net_forward.1} parent=1 // pred_check_branch
      %62 = sbr.rel (0) target = $region41
    $region40: #{net_forward.1} parent=1 // pred_region
      _
    $region41: #{net_forward.1} parent=1 // pred_fallthru
      _
    // Predicated region
    $region42: #{net_forward.1} parent=1 // pred_check
      _
    $region43: #{net_forward.1} parent=1 // pred_check_branch
      %64 = sbr.rel (0) target = $region45
    $region44: #{net_forward.1} parent=1 // pred_region
      %s66 = ssub.s32 64, 64
      %67 = vsyncadd [#allocation6], %s66
      %s69 = sshll.u32 %s10, 4
      %s70 = int_to_ptr.vmem [resolvable:$true] %s69
      %72 = dma.vmem_to_smem %s70, 64, [#allocation5], [#allocation6]
    $region45: #{net_forward.1} parent=1 // pred_fallthru
      _
    // Predicated region
    $region46: #{net_forward.1} parent=1 // pred_check
      _
    $region47: #{net_forward.1} parent=1 // pred_check_branch
      %74 = sbr.rel (0) target = $region49
    $region48: #{net_forward.1} parent=1 // pred_region
      _
    $region49: #{net_forward.1} parent=1 // pred_fallthru
      _
    // Predicated region
    $region50: #{net_forward.1} parent=1 // pred_check
      _
    $region51: #{net_forward.1} parent=1 // pred_check_branch
      %76 = sbr.rel (0) target = $region53
    $region52: #{net_forward.1} parent=1 // pred_region
      _
    $region53: #{net_forward.1} parent=1 // pred_fallthru
      _
    // Predicated region
    $region54: #{net_forward.1} parent=1 // pred_check
      _
    $region55: #{net_forward.1} parent=1 // pred_check_branch
      %78 = sbr.rel (0) target = $region57
    $region56: #{net_forward.1} parent=1 // pred_region
      _
    $region57: #{net_forward.1} parent=1 // pred_fallthru
      _
    // Predicated region
    $region58: #{net_forward.1} parent=1 // pred_check
      _
    $region59: #{net_forward.1} parent=1 // pred_check_branch
      %80 = sbr.rel (0) target = $region61
    $region60: #{net_forward.1} parent=1 // pred_region
      _
    $region61: #{net_forward.1} parent=1 // pred_fallthru
      _
    // Predicated region
    $region62: #{net_forward.1} parent=1 // pred_check
      _
    $region63: #{net_forward.1} parent=1 // pred_check_branch
      %82 = sbr.rel (0) target = $region65
    $region64: #{net_forward.1} parent=1 // pred_region
      _
    $region65: #{net_forward.1} parent=1 // pred_fallthru
      _
    // Predicated region
    $region66: #{net_forward.1} parent=1 // pred_check
      _
    $region67: #{net_forward.1} parent=1 // pred_check_branch
      %84 = sbr.rel (0) target = $region69
    $region68: #{net_forward.1} parent=1 // pred_region
      _
    $region69: #{net_forward.1} parent=1 // pred_fallthru
      _
    // Predicated region
    $region70: #{net_forward.1} parent=1 // pred_check
      _
    $region71: #{net_forward.1} parent=1 // pred_check_branch
      %86 = sbr.rel (0) target = $region73
    $region72: #{net_forward.1} parent=1 // pred_region
      _
    $region73: #{net_forward.1} parent=1 // pred_fallthru
      _
    // Predicated region
    $region74: #{net_forward.1} parent=1 // pred_check
      _
    $region75: #{net_forward.1} parent=1 // pred_check_branch
      %88 = sbr.rel (0) target = $region77
    $region76: #{net_forward.1} parent=1 // pred_region
      _
    $region77: #{net_forward.1} parent=1 // pred_fallthru
      _
    // Predicated region
    $region78: #{net_forward.1} parent=1 // pred_check
      _
    $region79: #{net_forward.1} parent=1 // pred_check_branch
      %90 = sbr.rel (0) target = $region81
    $region80: #{net_forward.1} parent=1 // pred_region
      _
    $region81: #{net_forward.1} parent=1 // pred_fallthru
      _
    // Predicated region
    $region82: #{net_forward.1} parent=1 // pred_check
      _
    $region83: #{net_forward.1} parent=1 // pred_check_branch
      %92 = sbr.rel (0) target = $region85
    $region84: #{net_forward.1} parent=1 // pred_region
      %93 = dma.done [#allocation4], 64
    $region85: #{net_forward.1} parent=1 // pred_fallthru
      _
    // Predicated region
    $region86: #{net_forward.1} parent=1 // pred_check
      _
    $region87: #{net_forward.1} parent=1 // pred_check_branch
      %95 = sbr.rel (0) target = $region89
    $region88: #{net_forward.1} parent=1 // pred_region
      %96 = dma.done [#allocation6], 64
    $region89: #{net_forward.1} parent=1 // pred_fallthru
      _
    %97 = sfence
    %v98 = vld [vmem:[%s0] sm:$0xff]
    %v99 = vld [vmem:[%s1] sm:$0xff]
    %v100 = vld [vmem:[%s2] sm:$0xff]
    %v101 = vld [vmem:[%s3] sm:$0xff]
    %s102 = sld [smem:[#allocation2]]
    %v103 = vld [vmem:[%s5] sm:$0xff]
    %v104 = vld [vmem:[%s5 + $0x8] sm:$0xff]
    %v105 = vstv %s102
    %v106 = vmul.f32 %v105, %v103
    %v107 = vmul.f32 %v105, %v104
    %s108 = sld [smem:[#allocation2 + $0x1]]
    %s109 = scalar_lea.vmem %s5, 16
    %v110 = vld [vmem:[%s109] sm:$0xff]
    %v111 = vld [vmem:[%s109 + $0x8] sm:$0xff]
    %v112 = vstv %s108
    %v113 = vmul.f32 %v112, %v110
    %v114 = vmul.f32 %v112, %v111
    %v115 = vadd.f32 %v106, %v113
    %v116 = vadd.f32 %v107, %v114
    %s117 = sld [smem:[#allocation2 + $0x2]]
    %s118 = scalar_lea.vmem %s5, 32
    %v119 = vld [vmem:[%s118] sm:$0xff]
    %v120 = vld [vmem:[%s118 + $0x8] sm:$0xff]
    %v121 = vstv %s117
    %v122 = vmul.f32 %v121, %v119
    %v123 = vmul.f32 %v121, %v120
    %v124 = vadd.f32 %v115, %v122
    %v125 = vadd.f32 %v116, %v123
    %s126 = sld [smem:[#allocation2 + $0x3]]
    %s127 = scalar_lea.vmem %s5, 48
    %v128 = vld [vmem:[%s127] sm:$0xff]
    %v129 = vld [vmem:[%s127 + $0x8] sm:$0xff]
    %v130 = vstv %s126
    %v131 = vmul.f32 %v130, %v128
    %v132 = vmul.f32 %v130, %v129
    %v133 = vadd.f32 %v124, %v131
    %v134 = vadd.f32 %v125, %v132
    %s135 = sld [smem:[#allocation2 + $0x80]]
    %v136 = vstv %s135
    %v137 = vmul.f32 %v136, %v103
    %v138 = vmul.f32 %v136, %v104
    %s139 = sld [smem:[#allocation2 + $0x81]]
    %v140 = vstv %s139
    %v141 = vmul.f32 %v140, %v110
    %v142 = vmul.f32 %v140, %v111
    %v143 = vadd.f32 %v137, %v141
    %v144 = vadd.f32 %v138, %v142
    %s145 = sld [smem:[#allocation2 + $0x82]]
    %v146 = vstv %s145
    %v147 = vmul.f32 %v146, %v119
    %v148 = vmul.f32 %v146, %v120
    %v149 = vadd.f32 %v143, %v147
    %v150 = vadd.f32 %v144, %v148
    %s151 = sld [smem:[#allocation2 + $0x83]]
    %v152 = vstv %s151
    %v153 = vmul.f32 %v152, %v128
    %v154 = vmul.f32 %v152, %v129
    %v155 = vadd.f32 %v149, %v153
    %v156 = vadd.f32 %v150, %v154
    %s157 = sld [smem:[#allocation2 + $0x100]]
    %v158 = vstv %s157
    %v159 = vmul.f32 %v158, %v103
    %v160 = vmul.f32 %v158, %v104
    %s161 = sld [smem:[#allocation2 + $0x101]]
    %v162 = vstv %s161
    %v163 = vmul.f32 %v162, %v110
    %v164 = vmul.f32 %v162, %v111
    %v165 = vadd.f32 %v159, %v163
    %v166 = vadd.f32 %v160, %v164
    %s167 = sld [smem:[#allocation2 + $0x102]]
    %v168 = vstv %s167
    %v169 = vmul.f32 %v168, %v119
    %v170 = vmul.f32 %v168, %v120
    %v171 = vadd.f32 %v165, %v169
    %v172 = vadd.f32 %v166, %v170
    %s173 = sld [smem:[#allocation2 + $0x103]]
    %v174 = vstv %s173
    %v175 = vmul.f32 %v174, %v128
    %v176 = vmul.f32 %v174, %v129
    %v177 = vadd.f32 %v171, %v175
    %v178 = vadd.f32 %v172, %v176
    %vm179 = vcmask 130048
    %v181 = vsel %vm179, %v98, 0
    %183 = vmatprep.subr.mxu0 0.0
    %184 = vmatpush1.msra.mxu0 %v133
    %185 = vmatprep.subr.mxu0 0.0
    %186 = vmatpush1.msra.mxu0 %v134
    %187 = vmatprep.subr.mxu0 0.0
    %188 = vmatpush1.msra.mxu0 0.0
    %189 = vmatprep.subr.mxu0 0.0
    %190 = vmatpush1.msra.mxu0 0.0
    %191 = vmatprep.subr.mxu0 0.0
    %192 = vmatpush1.msra.mxu0 0.0
    %193 = vmatprep.subr.mxu0 0.0
    %194 = vmatpush1.msra.mxu0 0.0
    %195 = vmatprep.subr.mxu0 0.0
    %196 = vmatpush1.msra.mxu0 0.0
    %197 = vmatprep.subr.mxu0 0.0
    %198 = vmatpush1.msra.mxu0 0.0
    %199 = vmatprep.subr.mxu0 0.0
    %200 = vmatpush1.msra.mxu0 0.0
    %201 = vmatprep.subr.mxu0 0.0
    %202 = vmatpush1.msra.mxu0 0.0
    %203 = vmatprep.subr.mxu0 0.0
    %204 = vmatpush1.msra.mxu0 0.0
    %205 = vmatprep.subr.mxu0 0.0
    %206 = vmatpush1.msra.mxu0 0.0
    %207 = vmatprep.subr.mxu0 0.0
    %208 = vmatpush1.msra.mxu0 0.0
    %209 = vmatprep.subr.mxu0 0.0
    %210 = vmatpush1.msra.mxu0 0.0
    %211 = vmatprep.subr.mxu0 0.0
    %212 = vmatpush1.msra.mxu0 0.0
    %213 = vmatprep.subr.mxu0 0.0
    %214 = vmatpush1.msra.mxu0 0.0
    %215 = vmatprep.subr.mxu0 0.0
    %216 = vmatpush1.msra.mxu0 0.0
    %217 = vmatprep.subr.mxu0 0.0
    %218 = vmatpush1.msra.mxu0 0.0
    %219 = vmatprep.subr.mxu0 0.0
    %220 = vmatpush1.msra.mxu0 0.0
    %221 = vmatprep.subr.mxu0 0.0
    %222 = vmatpush1.msra.mxu0 0.0
    %223 = vmatprep.subr.mxu0 0.0
    %224 = vmatpush1.msra.mxu0 0.0
    %225 = vmatprep.subr.mxu0 0.0
    %226 = vmatpush1.msra.mxu0 0.0
    %227 = vmatprep.subr.mxu0 0.0
    %228 = vmatpush1.msra.mxu0 0.0
    %229 = vmatprep.subr.mxu0 0.0
    %230 = vmatpush1.msra.mxu0 0.0
    %231 = vmatprep.subr.mxu0 0.0
    %232 = vmatpush1.msra.mxu0 0.0
    %233 = vmatprep.subr.mxu0 0.0
    %234 = vmatpush1.msra.mxu0 0.0
    %235 = vmatprep.subr.mxu0 0.0
    %236 = vmatpush1.msra.mxu0 0.0
    %237 = vmatprep.subr.mxu0 0.0
    %238 = vmatpush1.msra.mxu0 0.0
    %239 = vmatprep.subr.mxu0 0.0
    %240 = vmatpush1.msra.mxu0 0.0
    %241 = vmatprep.subr.mxu0 0.0
    %242 = vmatpush1.msra.mxu0 0.0
    %243 = vmatprep.subr.mxu0 0.0
    %244 = vmatpush1.msra.mxu0 0.0
    %245 = vmatprep.subr.mxu0 0.0
    %246 = vmatpush1.msra.mxu0 0.0
    %247 = vmatprep.mubr.f32.mxu0 0.0
    %248 = vmatmul.mubr.f32.gmra.mrb[0].mxu0 %v181
    %v249 = vpop.f32.mrb[0].mxu0
    %v250 = vadd.f32 0.0, %v249
    %v251 = vpop.f32.mrb[0].mxu0
    %252 = vdwg.mxu0
    %253 = vmatprep.subr.mxu0 0.0
    %254 = vmatpush1.msra.mxu0 %v155
    %255 = vmatprep.subr.mxu0 0.0
    %256 = vmatpush1.msra.mxu0 %v156
    %257 = vmatprep.subr.mxu0 0.0
    %258 = vmatpush1.msra.mxu0 0.0
    %259 = vmatprep.subr.mxu0 0.0
    %260 = vmatpush1.msra.mxu0 0.0
    %261 = vmatprep.subr.mxu0 0.0
    %262 = vmatpush1.msra.mxu0 0.0
    %263 = vmatprep.subr.mxu0 0.0
    %264 = vmatpush1.msra.mxu0 0.0
    %265 = vmatprep.subr.mxu0 0.0
    %266 = vmatpush1.msra.mxu0 0.0
    %267 = vmatprep.subr.mxu0 0.0
    %268 = vmatpush1.msra.mxu0 0.0
    %269 = vmatprep.subr.mxu0 0.0
    %270 = vmatpush1.msra.mxu0 0.0
    %271 = vmatprep.subr.mxu0 0.0
    %272 = vmatpush1.msra.mxu0 0.0
    %273 = vmatprep.subr.mxu0 0.0
    %274 = vmatpush1.msra.mxu0 0.0
    %275 = vmatprep.subr.mxu0 0.0
    %276 = vmatpush1.msra.mxu0 0.0
    %277 = vmatprep.subr.mxu0 0.0
    %278 = vmatpush1.msra.mxu0 0.0
    %279 = vmatprep.subr.mxu0 0.0
    %280 = vmatpush1.msra.mxu0 0.0
    %281 = vmatprep.subr.mxu0 0.0
    %282 = vmatpush1.msra.mxu0 0.0
    %283 = vmatprep.subr.mxu0 0.0
    %284 = vmatpush1.msra.mxu0 0.0
    %285 = vmatprep.subr.mxu0 0.0
    %286 = vmatpush1.msra.mxu0 0.0
    %287 = vmatprep.subr.mxu0 0.0
    %288 = vmatpush1.msra.mxu0 0.0
    %289 = vmatprep.subr.mxu0 0.0
    %290 = vmatpush1.msra.mxu0 0.0
    %291 = vmatprep.subr.mxu0 0.0
    %292 = vmatpush1.msra.mxu0 0.0
    %293 = vmatprep.subr.mxu0 0.0
    %294 = vmatpush1.msra.mxu0 0.0
    %295 = vmatprep.subr.mxu0 0.0
    %296 = vmatpush1.msra.mxu0 0.0
    %297 = vmatprep.subr.mxu0 0.0
    %298 = vmatpush1.msra.mxu0 0.0
    %299 = vmatprep.subr.mxu0 0.0
    %300 = vmatpush1.msra.mxu0 0.0
    %301 = vmatprep.subr.mxu0 0.0
    %302 = vmatpush1.msra.mxu0 0.0
    %303 = vmatprep.subr.mxu0 0.0
    %304 = vmatpush1.msra.mxu0 0.0
    %305 = vmatprep.subr.mxu0 0.0
    %306 = vmatpush1.msra.mxu0 0.0
    %307 = vmatprep.subr.mxu0 0.0
    %308 = vmatpush1.msra.mxu0 0.0
    %309 = vmatprep.subr.mxu0 0.0
    %310 = vmatpush1.msra.mxu0 0.0
    %311 = vmatprep.subr.mxu0 0.0
    %312 = vmatpush1.msra.mxu0 0.0
    %313 = vmatprep.subr.mxu0 0.0
    %314 = vmatpush1.msra.mxu0 0.0
    %315 = vmatprep.subr.mxu0 0.0
    %316 = vmatpush1.msra.mxu0 0.0
    %317 = vmatprep.mubr.f32.mxu0 0.0
    %318 = vmatmul.mubr.f32.gmra.mrb[0].mxu0 %v181
    %v319 = vpop.f32.mrb[0].mxu0
    %v320 = vadd.f32 0.0, %v319
    %v321 = vpop.f32.mrb[0].mxu0
    %322 = vdwg.mxu0
    %323 = vmatprep.subr.mxu0 0.0
    %324 = vmatpush1.msra.mxu0 %v177
    %325 = vmatprep.subr.mxu0 0.0
    %326 = vmatpush1.msra.mxu0 %v178
    %327 = vmatprep.subr.mxu0 0.0
    %328 = vmatpush1.msra.mxu0 0.0
    %329 = vmatprep.subr.mxu0 0.0
    %330 = vmatpush1.msra.mxu0 0.0
    %331 = vmatprep.subr.mxu0 0.0
    %332 = vmatpush1.msra.mxu0 0.0
    %333 = vmatprep.subr.mxu0 0.0
    %334 = vmatpush1.msra.mxu0 0.0
    %335 = vmatprep.subr.mxu0 0.0
    %336 = vmatpush1.msra.mxu0 0.0
    %337 = vmatprep.subr.mxu0 0.0
    %338 = vmatpush1.msra.mxu0 0.0
    %339 = vmatprep.subr.mxu0 0.0
    %340 = vmatpush1.msra.mxu0 0.0
    %341 = vmatprep.subr.mxu0 0.0
    %342 = vmatpush1.msra.mxu0 0.0
    %343 = vmatprep.subr.mxu0 0.0
    %344 = vmatpush1.msra.mxu0 0.0
    %345 = vmatprep.subr.mxu0 0.0
    %346 = vmatpush1.msra.mxu0 0.0
    %347 = vmatprep.subr.mxu0 0.0
    %348 = vmatpush1.msra.mxu0 0.0
    %349 = vmatprep.subr.mxu0 0.0
    %350 = vmatpush1.msra.mxu0 0.0
    %351 = vmatprep.subr.mxu0 0.0
    %352 = vmatpush1.msra.mxu0 0.0
    %353 = vmatprep.subr.mxu0 0.0
    %354 = vmatpush1.msra.mxu0 0.0
    %355 = vmatprep.subr.mxu0 0.0
    %356 = vmatpush1.msra.mxu0 0.0
    %357 = vmatprep.subr.mxu0 0.0
    %358 = vmatpush1.msra.mxu0 0.0
    %359 = vmatprep.subr.mxu0 0.0
    %360 = vmatpush1.msra.mxu0 0.0
    %361 = vmatprep.subr.mxu0 0.0
    %362 = vmatpush1.msra.mxu0 0.0
    %363 = vmatprep.subr.mxu0 0.0
    %364 = vmatpush1.msra.mxu0 0.0
    %365 = vmatprep.subr.mxu0 0.0
    %366 = vmatpush1.msra.mxu0 0.0
    %367 = vmatprep.subr.mxu0 0.0
    %368 = vmatpush1.msra.mxu0 0.0
    %369 = vmatprep.subr.mxu0 0.0
    %370 = vmatpush1.msra.mxu0 0.0
    %371 = vmatprep.subr.mxu0 0.0
    %372 = vmatpush1.msra.mxu0 0.0
    %373 = vmatprep.subr.mxu0 0.0
    %374 = vmatpush1.msra.mxu0 0.0
    %375 = vmatprep.subr.mxu0 0.0
    %376 = vmatpush1.msra.mxu0 0.0
    %377 = vmatprep.subr.mxu0 0.0
    %378 = vmatpush1.msra.mxu0 0.0
    %379 = vmatprep.subr.mxu0 0.0
    %380 = vmatpush1.msra.mxu0 0.0
    %381 = vmatprep.subr.mxu0 0.0
    %382 = vmatpush1.msra.mxu0 0.0
    %383 = vmatprep.subr.mxu0 0.0
    %384 = vmatpush1.msra.mxu0 0.0
    %385 = vmatprep.subr.mxu0 0.0
    %386 = vmatpush1.msra.mxu0 0.0
    %387 = vmatprep.mubr.f32.mxu0 0.0
    %388 = vmatmul.mubr.f32.gmra.mrb[0].mxu0 %v181
    %v389 = vpop.f32.mrb[0].mxu0
    %v390 = vadd.f32 0.0, %v389
    %v391 = vpop.f32.mrb[0].mxu0
    %392 = vdwg.mxu0
    %vm393 = vcmask 195584
    %v395 = vsel %vm393, %v100, 0
    %397 = vmatprep.subr.mxu0 0.0
    %398 = vmatpush1.msra.mxu0 %v250
    %399 = vmatprep.subr.mxu0 0.0
    %400 = vmatpush1.msra.mxu0 %v320
    %401 = vmatprep.subr.mxu0 0.0
    %402 = vmatpush1.msra.mxu0 %v390
    %403 = vmatprep.subr.mxu0 0.0
    %404 = vmatpush1.msra.mxu0 0.0
    %405 = vmatprep.subr.mxu0 0.0
    %406 = vmatpush1.msra.mxu0 0.0
    %407 = vmatprep.subr.mxu0 0.0
    %408 = vmatpush1.msra.mxu0 0.0
    %409 = vmatprep.subr.mxu0 0.0
    %410 = vmatpush1.msra.mxu0 0.0
    %411 = vmatprep.subr.mxu0 0.0
    %412 = vmatpush1.msra.mxu0 0.0
    %413 = vmatprep.subr.mxu0 0.0
    %414 = vmatpush1.msra.mxu0 0.0
    %415 = vmatprep.subr.mxu0 0.0
    %416 = vmatpush1.msra.mxu0 0.0
    %417 = vmatprep.subr.mxu0 0.0
    %418 = vmatpush1.msra.mxu0 0.0
    %419 = vmatprep.subr.mxu0 0.0
    %420 = vmatpush1.msra.mxu0 0.0
    %421 = vmatprep.subr.mxu0 0.0
    %422 = vmatpush1.msra.mxu0 0.0
    %423 = vmatprep.subr.mxu0 0.0
    %424 = vmatpush1.msra.mxu0 0.0
    %425 = vmatprep.subr.mxu0 0.0
    %426 = vmatpush1.msra.mxu0 0.0
    %427 = vmatprep.subr.mxu0 0.0
    %428 = vmatpush1.msra.mxu0 0.0
    %429 = vmatprep.subr.mxu0 0.0
    %430 = vmatpush1.msra.mxu0 0.0
    %431 = vmatprep.subr.mxu0 0.0
    %432 = vmatpush1.msra.mxu0 0.0
    %433 = vmatprep.subr.mxu0 0.0
    %434 = vmatpush1.msra.mxu0 0.0
    %435 = vmatprep.subr.mxu0 0.0
    %436 = vmatpush1.msra.mxu0 0.0
    %437 = vmatprep.subr.mxu0 0.0
    %438 = vmatpush1.msra.mxu0 0.0
    %439 = vmatprep.subr.mxu0 0.0
    %440 = vmatpush1.msra.mxu0 0.0
    %441 = vmatprep.subr.mxu0 0.0
    %442 = vmatpush1.msra.mxu0 0.0
    %443 = vmatprep.subr.mxu0 0.0
    %444 = vmatpush1.msra.mxu0 0.0
    %445 = vmatprep.subr.mxu0 0.0
    %446 = vmatpush1.msra.mxu0 0.0
    %447 = vmatprep.subr.mxu0 0.0
    %448 = vmatpush1.msra.mxu0 0.0
    %449 = vmatprep.subr.mxu0 0.0
    %450 = vmatpush1.msra.mxu0 0.0
    %451 = vmatprep.subr.mxu0 0.0
    %452 = vmatpush1.msra.mxu0 0.0
    %453 = vmatprep.subr.mxu0 0.0
    %454 = vmatpush1.msra.mxu0 0.0
    %455 = vmatprep.subr.mxu0 0.0
    %456 = vmatpush1.msra.mxu0 0.0
    %457 = vmatprep.subr.mxu0 0.0
    %458 = vmatpush1.msra.mxu0 0.0
    %459 = vmatprep.subr.mxu0 0.0
    %460 = vmatpush1.msra.mxu0 0.0
    %461 = vmatprep.mubr.f32.mxu0 0.0
    %462 = vmatmul.mubr.f32.gmra.mrb[0].mxu0 %v395
    %v463 = vpop.f32.mrb[0].mxu0
    %v464 = vadd.f32 0.0, %v463
    %v465 = vpop.f32.mrb[0].mxu0
    %466 = vdwg.mxu0
    %vm467 = vcmp.gt.f32.partialorder %v464, 0.0
    %v468 = vmul.f32 %v464, 0.1
    %v469 = vsel %vm467, %v464, %v468
    %v471 = vsel %vm179, %v99, 0
    %473 = vmatprep.subr.mxu0 0.0
    %474 = vmatpush1.msra.mxu0 %v133
    %475 = vmatprep.subr.mxu0 0.0
    %476 = vmatpush1.msra.mxu0 %v134
    %477 = vmatprep.subr.mxu0 0.0
    %478 = vmatpush1.msra.mxu0 0.0
    %479 = vmatprep.subr.mxu0 0.0
    %480 = vmatpush1.msra.mxu0 0.0
    %481 = vmatprep.subr.mxu0 0.0
    %482 = vmatpush1.msra.mxu0 0.0
    %483 = vmatprep.subr.mxu0 0.0
    %484 = vmatpush1.msra.mxu0 0.0
    %485 = vmatprep.subr.mxu0 0.0
    %486 = vmatpush1.msra.mxu0 0.0
    %487 = vmatprep.subr.mxu0 0.0
    %488 = vmatpush1.msra.mxu0 0.0
    %489 = vmatprep.subr.mxu0 0.0
    %490 = vmatpush1.msra.mxu0 0.0
    %491 = vmatprep.subr.mxu0 0.0
    %492 = vmatpush1.msra.mxu0 0.0
    %493 = vmatprep.subr.mxu0 0.0
    %494 = vmatpush1.msra.mxu0 0.0
    %495 = vmatprep.subr.mxu0 0.0
    %496 = vmatpush1.msra.mxu0 0.0
    %497 = vmatprep.subr.mxu0 0.0
    %498 = vmatpush1.msra.mxu0 0.0
    %499 = vmatprep.subr.mxu0 0.0
    %500 = vmatpush1.msra.mxu0 0.0
    %501 = vmatprep.subr.mxu0 0.0
    %502 = vmatpush1.msra.mxu0 0.0
    %503 = vmatprep.subr.mxu0 0.0
    %504 = vmatpush1.msra.mxu0 0.0
    %505 = vmatprep.subr.mxu0 0.0
    %506 = vmatpush1.msra.mxu0 0.0
    %507 = vmatprep.subr.mxu0 0.0
    %508 = vmatpush1.msra.mxu0 0.0
    %509 = vmatprep.subr.mxu0 0.0
    %510 = vmatpush1.msra.mxu0 0.0
    %511 = vmatprep.subr.mxu0 0.0
    %512 = vmatpush1.msra.mxu0 0.0
    %513 = vmatprep.subr.mxu0 0.0
    %514 = vmatpush1.msra.mxu0 0.0
    %515 = vmatprep.subr.mxu0 0.0
    %516 = vmatpush1.msra.mxu0 0.0
    %517 = vmatprep.subr.mxu0 0.0
    %518 = vmatpush1.msra.mxu0 0.0
    %519 = vmatprep.subr.mxu0 0.0
    %520 = vmatpush1.msra.mxu0 0.0
    %521 = vmatprep.subr.mxu0 0.0
    %522 = vmatpush1.msra.mxu0 0.0
    %523 = vmatprep.subr.mxu0 0.0
    %524 = vmatpush1.msra.mxu0 0.0
    %525 = vmatprep.subr.mxu0 0.0
    %526 = vmatpush1.msra.mxu0 0.0
    %527 = vmatprep.subr.mxu0 0.0
    %528 = vmatpush1.msra.mxu0 0.0
    %529 = vmatprep.subr.mxu0 0.0
    %530 = vmatpush1.msra.mxu0 0.0
    %531 = vmatprep.subr.mxu0 0.0
    %532 = vmatpush1.msra.mxu0 0.0
    %533 = vmatprep.subr.mxu0 0.0
    %534 = vmatpush1.msra.mxu0 0.0
    %535 = vmatprep.subr.mxu0 0.0
    %536 = vmatpush1.msra.mxu0 0.0
    %537 = vmatprep.mubr.f32.mxu0 0.0
    %538 = vmatmul.mubr.f32.gmra.mrb[0].mxu0 %v471
    %v539 = vpop.f32.mrb[0].mxu0
    %v540 = vadd.f32 0.0, %v539
    %v541 = vpop.f32.mrb[0].mxu0
    %542 = vdwg.mxu0
    %543 = vmatprep.subr.mxu0 0.0
    %544 = vmatpush1.msra.mxu0 %v155
    %545 = vmatprep.subr.mxu0 0.0
    %546 = vmatpush1.msra.mxu0 %v156
    %547 = vmatprep.subr.mxu0 0.0
    %548 = vmatpush1.msra.mxu0 0.0
    %549 = vmatprep.subr.mxu0 0.0
    %550 = vmatpush1.msra.mxu0 0.0
    %551 = vmatprep.subr.mxu0 0.0
    %552 = vmatpush1.msra.mxu0 0.0
    %553 = vmatprep.subr.mxu0 0.0
    %554 = vmatpush1.msra.mxu0 0.0
    %555 = vmatprep.subr.mxu0 0.0
    %556 = vmatpush1.msra.mxu0 0.0
    %557 = vmatprep.subr.mxu0 0.0
    %558 = vmatpush1.msra.mxu0 0.0
    %559 = vmatprep.subr.mxu0 0.0
    %560 = vmatpush1.msra.mxu0 0.0
    %561 = vmatprep.subr.mxu0 0.0
    %562 = vmatpush1.msra.mxu0 0.0
    %563 = vmatprep.subr.mxu0 0.0
    %564 = vmatpush1.msra.mxu0 0.0
    %565 = vmatprep.subr.mxu0 0.0
    %566 = vmatpush1.msra.mxu0 0.0
    %567 = vmatprep.subr.mxu0 0.0
    %568 = vmatpush1.msra.mxu0 0.0
    %569 = vmatprep.subr.mxu0 0.0
    %570 = vmatpush1.msra.mxu0 0.0
    %571 = vmatprep.subr.mxu0 0.0
    %572 = vmatpush1.msra.mxu0 0.0
    %573 = vmatprep.subr.mxu0 0.0
    %574 = vmatpush1.msra.mxu0 0.0
    %575 = vmatprep.subr.mxu0 0.0
    %576 = vmatpush1.msra.mxu0 0.0
    %577 = vmatprep.subr.mxu0 0.0
    %578 = vmatpush1.msra.mxu0 0.0
    %579 = vmatprep.subr.mxu0 0.0
    %580 = vmatpush1.msra.mxu0 0.0
    %581 = vmatprep.subr.mxu0 0.0
    %582 = vmatpush1.msra.mxu0 0.0
    %583 = vmatprep.subr.mxu0 0.0
    %584 = vmatpush1.msra.mxu0 0.0
    %585 = vmatprep.subr.mxu0 0.0
    %586 = vmatpush1.msra.mxu0 0.0
    %587 = vmatprep.subr.mxu0 0.0
    %588 = vmatpush1.msra.mxu0 0.0
    %589 = vmatprep.subr.mxu0 0.0
    %590 = vmatpush1.msra.mxu0 0.0
    %591 = vmatprep.subr.mxu0 0.0
    %592 = vmatpush1.msra.mxu0 0.0
    %593 = vmatprep.subr.mxu0 0.0
    %594 = vmatpush1.msra.mxu0 0.0
    %595 = vmatprep.subr.mxu0 0.0
    %596 = vmatpush1.msra.mxu0 0.0
    %597 = vmatprep.subr.mxu0 0.0
    %598 = vmatpush1.msra.mxu0 0.0
    %599 = vmatprep.subr.mxu0 0.0
    %600 = vmatpush1.msra.mxu0 0.0
    %601 = vmatprep.subr.mxu0 0.0
    %602 = vmatpush1.msra.mxu0 0.0
    %603 = vmatprep.subr.mxu0 0.0
    %604 = vmatpush1.msra.mxu0 0.0
    %605 = vmatprep.subr.mxu0 0.0
    %606 = vmatpush1.msra.mxu0 0.0
    %607 = vmatprep.mubr.f32.mxu0 0.0
    %608 = vmatmul.mubr.f32.gmra.mrb[0].mxu0 %v471
    %v609 = vpop.f32.mrb[0].mxu0
    %v610 = vadd.f32 0.0, %v609
    %v611 = vpop.f32.mrb[0].mxu0
    %612 = vdwg.mxu0
    %613 = vmatprep.subr.mxu0 0.0
    %614 = vmatpush1.msra.mxu0 %v177
    %615 = vmatprep.subr.mxu0 0.0
    %616 = vmatpush1.msra.mxu0 %v178
    %617 = vmatprep.subr.mxu0 0.0
    %618 = vmatpush1.msra.mxu0 0.0
    %619 = vmatprep.subr.mxu0 0.0
    %620 = vmatpush1.msra.mxu0 0.0
    %621 = vmatprep.subr.mxu0 0.0
    %622 = vmatpush1.msra.mxu0 0.0
    %623 = vmatprep.subr.mxu0 0.0
    %624 = vmatpush1.msra.mxu0 0.0
    %625 = vmatprep.subr.mxu0 0.0
    %626 = vmatpush1.msra.mxu0 0.0
    %627 = vmatprep.subr.mxu0 0.0
    %628 = vmatpush1.msra.mxu0 0.0
    %629 = vmatprep.subr.mxu0 0.0
    %630 = vmatpush1.msra.mxu0 0.0
    %631 = vmatprep.subr.mxu0 0.0
    %632 = vmatpush1.msra.mxu0 0.0
    %633 = vmatprep.subr.mxu0 0.0
    %634 = vmatpush1.msra.mxu0 0.0
    %635 = vmatprep.subr.mxu0 0.0
    %636 = vmatpush1.msra.mxu0 0.0
    %637 = vmatprep.subr.mxu0 0.0
    %638 = vmatpush1.msra.mxu0 0.0
    %639 = vmatprep.subr.mxu0 0.0
    %640 = vmatpush1.msra.mxu0 0.0
    %641 = vmatprep.subr.mxu0 0.0
    %642 = vmatpush1.msra.mxu0 0.0
    %643 = vmatprep.subr.mxu0 0.0
    %644 = vmatpush1.msra.mxu0 0.0
    %645 = vmatprep.subr.mxu0 0.0
    %646 = vmatpush1.msra.mxu0 0.0
    %647 = vmatprep.subr.mxu0 0.0
    %648 = vmatpush1.msra.mxu0 0.0
    %649 = vmatprep.subr.mxu0 0.0
    %650 = vmatpush1.msra.mxu0 0.0
    %651 = vmatprep.subr.mxu0 0.0
    %652 = vmatpush1.msra.mxu0 0.0
    %653 = vmatprep.subr.mxu0 0.0
    %654 = vmatpush1.msra.mxu0 0.0
    %655 = vmatprep.subr.mxu0 0.0
    %656 = vmatpush1.msra.mxu0 0.0
    %657 = vmatprep.subr.mxu0 0.0
    %658 = vmatpush1.msra.mxu0 0.0
    %659 = vmatprep.subr.mxu0 0.0
    %660 = vmatpush1.msra.mxu0 0.0
    %661 = vmatprep.subr.mxu0 0.0
    %662 = vmatpush1.msra.mxu0 0.0
    %663 = vmatprep.subr.mxu0 0.0
    %664 = vmatpush1.msra.mxu0 0.0
    %665 = vmatprep.subr.mxu0 0.0
    %666 = vmatpush1.msra.mxu0 0.0
    %667 = vmatprep.subr.mxu0 0.0
    %668 = vmatpush1.msra.mxu0 0.0
    %669 = vmatprep.subr.mxu0 0.0
    %670 = vmatpush1.msra.mxu0 0.0
    %671 = vmatprep.subr.mxu0 0.0
    %672 = vmatpush1.msra.mxu0 0.0
    %673 = vmatprep.subr.mxu0 0.0
    %674 = vmatpush1.msra.mxu0 0.0
    %675 = vmatprep.subr.mxu0 0.0
    %676 = vmatpush1.msra.mxu0 0.0
    %677 = vmatprep.mubr.f32.mxu0 0.0
    %678 = vmatmul.mubr.f32.gmra.mrb[0].mxu0 %v471
    %v679 = vpop.f32.mrb[0].mxu0
    %v680 = vadd.f32 0.0, %v679
    %v681 = vpop.f32.mrb[0].mxu0
    %682 = vdwg.mxu0
    %v684 = vsel %vm393, %v101, 0
    %686 = vmatprep.subr.mxu0 0.0
    %687 = vmatpush1.msra.mxu0 %v540
    %688 = vmatprep.subr.mxu0 0.0
    %689 = vmatpush1.msra.mxu0 %v610
    %690 = vmatprep.subr.mxu0 0.0
    %691 = vmatpush1.msra.mxu0 %v680
    %692 = vmatprep.subr.mxu0 0.0
    %693 = vmatpush1.msra.mxu0 0.0
    %694 = vmatprep.subr.mxu0 0.0
    %695 = vmatpush1.msra.mxu0 0.0
    %696 = vmatprep.subr.mxu0 0.0
    %697 = vmatpush1.msra.mxu0 0.0
    %698 = vmatprep.subr.mxu0 0.0
    %699 = vmatpush1.msra.mxu0 0.0
    %700 = vmatprep.subr.mxu0 0.0
    %701 = vmatpush1.msra.mxu0 0.0
    %702 = vmatprep.subr.mxu0 0.0
    %703 = vmatpush1.msra.mxu0 0.0
    %704 = vmatprep.subr.mxu0 0.0
    %705 = vmatpush1.msra.mxu0 0.0
    %706 = vmatprep.subr.mxu0 0.0
    %707 = vmatpush1.msra.mxu0 0.0
    %708 = vmatprep.subr.mxu0 0.0
    %709 = vmatpush1.msra.mxu0 0.0
    %710 = vmatprep.subr.mxu0 0.0
    %711 = vmatpush1.msra.mxu0 0.0
    %712 = vmatprep.subr.mxu0 0.0
    %713 = vmatpush1.msra.mxu0 0.0
    %714 = vmatprep.subr.mxu0 0.0
    %715 = vmatpush1.msra.mxu0 0.0
    %716 = vmatprep.subr.mxu0 0.0
    %717 = vmatpush1.msra.mxu0 0.0
    %718 = vmatprep.subr.mxu0 0.0
    %719 = vmatpush1.msra.mxu0 0.0
    %720 = vmatprep.subr.mxu0 0.0
    %721 = vmatpush1.msra.mxu0 0.0
    %722 = vmatprep.subr.mxu0 0.0
    %723 = vmatpush1.msra.mxu0 0.0
    %724 = vmatprep.subr.mxu0 0.0
    %725 = vmatpush1.msra.mxu0 0.0
    %726 = vmatprep.subr.mxu0 0.0
    %727 = vmatpush1.msra.mxu0 0.0
    %728 = vmatprep.subr.mxu0 0.0
    %729 = vmatpush1.msra.mxu0 0.0
    %730 = vmatprep.subr.mxu0 0.0
    %731 = vmatpush1.msra.mxu0 0.0
    %732 = vmatprep.subr.mxu0 0.0
    %733 = vmatpush1.msra.mxu0 0.0
    %734 = vmatprep.subr.mxu0 0.0
    %735 = vmatpush1.msra.mxu0 0.0
    %736 = vmatprep.subr.mxu0 0.0
    %737 = vmatpush1.msra.mxu0 0.0
    %738 = vmatprep.subr.mxu0 0.0
    %739 = vmatpush1.msra.mxu0 0.0
    %740 = vmatprep.subr.mxu0 0.0
    %741 = vmatpush1.msra.mxu0 0.0
    %742 = vmatprep.subr.mxu0 0.0
    %743 = vmatpush1.msra.mxu0 0.0
    %744 = vmatprep.subr.mxu0 0.0
    %745 = vmatpush1.msra.mxu0 0.0
    %746 = vmatprep.subr.mxu0 0.0
    %747 = vmatpush1.msra.mxu0 0.0
    %748 = vmatprep.subr.mxu0 0.0
    %749 = vmatpush1.msra.mxu0 0.0
    %750 = vmatprep.mubr.f32.mxu0 0.0
    %751 = vmatmul.mubr.f32.gmra.mrb[0].mxu0 %v684
    %v752 = vpop.f32.mrb[0].mxu0
    %v753 = vadd.f32 0.0, %v752
    %v754 = vpop.f32.mrb[0].mxu0
    %755 = vdwg.mxu0
    %vm756 = vcmp.gt.f32.partialorder %v753, 0.0
    %v757 = vmul.f32 %v753, 0.1
    %v758 = vsel %vm756, %v753, %v757
    %v759 = vld [vmem:[%s6] sm:$0xff]
    %v760 = vld [vmem:[%s6 + $0x8] sm:$0xff]
    %v761 = vld [vmem:[%s6 + $0x10] sm:$0xff]
    %v762 = vld [vmem:[%s7] sm:$0x1]
    %v764 = vlaneseq
    %v765 = vshrl.u32 %v764, 7
    %v766 = vsub.s32 0, %v765
    %v767 = vrot.slane %v762, %v766
    %v770 = vsel %vm393, %v758, 0
    %772 = vmatprep.subr.mxu0 0.0
    %773 = vmatpush1.msra.mxu0 %v759
    %774 = vmatprep.subr.mxu0 0.0
    %775 = vmatpush1.msra.mxu0 %v760
    %776 = vmatprep.subr.mxu0 0.0
    %777 = vmatpush1.msra.mxu0 %v761
    %778 = vmatprep.subr.mxu0 0.0
    %779 = vmatpush1.msra.mxu0 0.0
    %780 = vmatprep.subr.mxu0 0.0
    %781 = vmatpush1.msra.mxu0 0.0
    %782 = vmatprep.subr.mxu0 0.0
    %783 = vmatpush1.msra.mxu0 0.0
    %784 = vmatprep.subr.mxu0 0.0
    %785 = vmatpush1.msra.mxu0 0.0
    %786 = vmatprep.subr.mxu0 0.0
    %787 = vmatpush1.msra.mxu0 0.0
    %788 = vmatprep.subr.mxu0 0.0
    %789 = vmatpush1.msra.mxu0 0.0
    %790 = vmatprep.subr.mxu0 0.0
    %791 = vmatpush1.msra.mxu0 0.0
    %792 = vmatprep.subr.mxu0 0.0
    %793 = vmatpush1.msra.mxu0 0.0
    %794 = vmatprep.subr.mxu0 0.0
    %795 = vmatpush1.msra.mxu0 0.0
    %796 = vmatprep.subr.mxu0 0.0
    %797 = vmatpush1.msra.mxu0 0.0
    %798 = vmatprep.subr.mxu0 0.0
    %799 = vmatpush1.msra.mxu0 0.0
    %800 = vmatprep.subr.mxu0 0.0
    %801 = vmatpush1.msra.mxu0 0.0
    %802 = vmatprep.subr.mxu0 0.0
    %803 = vmatpush1.msra.mxu0 0.0
    %804 = vmatprep.subr.mxu0 0.0
    %805 = vmatpush1.msra.mxu0 0.0
    %806 = vmatprep.subr.mxu0 0.0
    %807 = vmatpush1.msra.mxu0 0.0
    %808 = vmatprep.subr.mxu0 0.0
    %809 = vmatpush1.msra.mxu0 0.0
    %810 = vmatprep.subr.mxu0 0.0
    %811 = vmatpush1.msra.mxu0 0.0
    %812 = vmatprep.subr.mxu0 0.0
    %813 = vmatpush1.msra.mxu0 0.0
    %814 = vmatprep.subr.mxu0 0.0
    %815 = vmatpush1.msra.mxu0 0.0
    %816 = vmatprep.subr.mxu0 0.0
    %817 = vmatpush1.msra.mxu0 0.0
    %818 = vmatprep.subr.mxu0 0.0
    %819 = vmatpush1.msra.mxu0 0.0
    %820 = vmatprep.subr.mxu0 0.0
    %821 = vmatpush1.msra.mxu0 0.0
    %822 = vmatprep.subr.mxu0 0.0
    %823 = vmatpush1.msra.mxu0 0.0
    %824 = vmatprep.subr.mxu0 0.0
    %825 = vmatpush1.msra.mxu0 0.0
    %826 = vmatprep.subr.mxu0 0.0
    %827 = vmatpush1.msra.mxu0 0.0
    %828 = vmatprep.subr.mxu0 0.0
    %829 = vmatpush1.msra.mxu0 0.0
    %830 = vmatprep.subr.mxu0 0.0
    %831 = vmatpush1.msra.mxu0 0.0
    %832 = vmatprep.subr.mxu0 0.0
    %833 = vmatpush1.msra.mxu0 0.0
    %834 = vmatprep.subr.mxu0 0.0
    %835 = vmatpush1.msra.mxu0 0.0
    %836 = vmatprep.mubr.f32.mxu0 0.0
    %837 = vmatmul.mubr.f32.gmra.mrb[0].mxu0 %v770
    %v838 = vpop.f32.mrb[0].mxu0
    %v839 = vadd.f32 %v767, %v838
    %v840 = vpop.f32.mrb[0].mxu0
    %841 = vdwg.mxu0
    %v842 = vld [vmem:[%s8] sm:$0xff]
    %v843 = vld [vmem:[%s8 + $0x8] sm:$0xff]
    %v844 = vld [vmem:[%s8 + $0x10] sm:$0xff]
    %v845 = vld [vmem:[%s9] sm:$0x1]
    %v847 = vlaneseq
    %v848 = vshrl.u32 %v847, 7
    %v849 = vsub.s32 0, %v848
    %v850 = vrot.slane %v845, %v849
    %v853 = vsel %vm393, %v469, 0
    %855 = vmatprep.subr.mxu0 0.0
    %856 = vmatpush1.msra.mxu0 %v842
    %857 = vmatprep.subr.mxu0 0.0
    %858 = vmatpush1.msra.mxu0 %v843
    %859 = vmatprep.subr.mxu0 0.0
    %860 = vmatpush1.msra.mxu0 %v844
    %861 = vmatprep.subr.mxu0 0.0
    %862 = vmatpush1.msra.mxu0 0.0
    %863 = vmatprep.subr.mxu0 0.0
    %864 = vmatpush1.msra.mxu0 0.0
    %865 = vmatprep.subr.mxu0 0.0
    %866 = vmatpush1.msra.mxu0 0.0
    %867 = vmatprep.subr.mxu0 0.0
    %868 = vmatpush1.msra.mxu0 0.0
    %869 = vmatprep.subr.mxu0 0.0
    %870 = vmatpush1.msra.mxu0 0.0
    %871 = vmatprep.subr.mxu0 0.0
    %872 = vmatpush1.msra.mxu0 0.0
    %873 = vmatprep.subr.mxu0 0.0
    %874 = vmatpush1.msra.mxu0 0.0
    %875 = vmatprep.subr.mxu0 0.0
    %876 = vmatpush1.msra.mxu0 0.0
    %877 = vmatprep.subr.mxu0 0.0
    %878 = vmatpush1.msra.mxu0 0.0
    %879 = vmatprep.subr.mxu0 0.0
    %880 = vmatpush1.msra.mxu0 0.0
    %881 = vmatprep.subr.mxu0 0.0
    %882 = vmatpush1.msra.mxu0 0.0
    %883 = vmatprep.subr.mxu0 0.0
    %884 = vmatpush1.msra.mxu0 0.0
    %885 = vmatprep.subr.mxu0 0.0
    %886 = vmatpush1.msra.mxu0 0.0
    %887 = vmatprep.subr.mxu0 0.0
    %888 = vmatpush1.msra.mxu0 0.0
    %889 = vmatprep.subr.mxu0 0.0
    %890 = vmatpush1.msra.mxu0 0.0
    %891 = vmatprep.subr.mxu0 0.0
    %892 = vmatpush1.msra.mxu0 0.0
    %893 = vmatprep.subr.mxu0 0.0
    %894 = vmatpush1.msra.mxu0 0.0
    %895 = vmatprep.subr.mxu0 0.0
    %896 = vmatpush1.msra.mxu0 0.0
    %897 = vmatprep.subr.mxu0 0.0
    %898 = vmatpush1.msra.mxu0 0.0
    %899 = vmatprep.subr.mxu0 0.0
    %900 = vmatpush1.msra.mxu0 0.0
    %901 = vmatprep.subr.mxu0 0.0
    %902 = vmatpush1.msra.mxu0 0.0
    %903 = vmatprep.subr.mxu0 0.0
    %904 = vmatpush1.msra.mxu0 0.0
    %905 = vmatprep.subr.mxu0 0.0
    %906 = vmatpush1.msra.mxu0 0.0
    %907 = vmatprep.subr.mxu0 0.0
    %908 = vmatpush1.msra.mxu0 0.0
    %909 = vmatprep.subr.mxu0 0.0
    %910 = vmatpush1.msra.mxu0 0.0
    %911 = vmatprep.subr.mxu0 0.0
    %912 = vmatpush1.msra.mxu0 0.0
    %913 = vmatprep.subr.mxu0 0.0
    %914 = vmatpush1.msra.mxu0 0.0
    %915 = vmatprep.subr.mxu0 0.0
    %916 = vmatpush1.msra.mxu0 0.0
    %917 = vmatprep.subr.mxu0 0.0
    %918 = vmatpush1.msra.mxu0 0.0
    %919 = vmatprep.mubr.f32.mxu0 0.0
    %920 = vmatmul.mubr.f32.gmra.mrb[0].mxu0 %v853
    %v921 = vpop.f32.mrb[0].mxu0
    %v922 = vadd.f32 %v850, %v921
    %v923 = vpop.f32.mrb[0].mxu0
    %924 = vdwg.mxu0
    %s925 = sld [smem:[#allocation5]]
    %v926 = vld [vmem:[%s11] sm:$0xff]
    %v927 = vld [vmem:[%s11 + $0x8] sm:$0xff]
    %v928 = vstv %s925
    %v929 = vmul.f32 %v928, %v926
    %v930 = vmul.f32 %v928, %v927
    %s931 = sld [smem:[#allocation5 + $0x1]]
    %s932 = scalar_lea.vmem %s11, 16
    %v933 = vld [vmem:[%s932] sm:$0xff]
    %v934 = vld [vmem:[%s932 + $0x8] sm:$0xff]
    %v935 = vstv %s931
    %v936 = vmul.f32 %v935, %v933
    %v937 = vmul.f32 %v935, %v934
    %v938 = vadd.f32 %v929, %v936
    %v939 = vadd.f32 %v930, %v937
    %s940 = sld [smem:[#allocation5 + $0x2]]
    %s941 = scalar_lea.vmem %s11, 32
    %v942 = vld [vmem:[%s941] sm:$0xff]
    %v943 = vld [vmem:[%s941 + $0x8] sm:$0xff]
    %v944 = vstv %s940
    %v945 = vmul.f32 %v944, %v942
    %v946 = vmul.f32 %v944, %v943
    %v947 = vadd.f32 %v938, %v945
    %v948 = vadd.f32 %v939, %v946
    %s949 = sld [smem:[#allocation5 + $0x3]]
    %s950 = scalar_lea.vmem %s11, 48
    %v951 = vld [vmem:[%s950] sm:$0xff]
    %v952 = vld [vmem:[%s950 + $0x8] sm:$0xff]
    %v953 = vstv %s949
    %v954 = vmul.f32 %v953, %v951
    %v955 = vmul.f32 %v953, %v952
    %v956 = vadd.f32 %v947, %v954
    %v957 = vadd.f32 %v948, %v955
    %s958 = sld [smem:[#allocation5 + $0x80]]
    %v959 = vstv %s958
    %v960 = vmul.f32 %v959, %v926
    %v961 = vmul.f32 %v959, %v927
    %s962 = sld [smem:[#allocation5 + $0x81]]
    %v963 = vstv %s962
    %v964 = vmul.f32 %v963, %v933
    %v965 = vmul.f32 %v963, %v934
    %v966 = vadd.f32 %v960, %v964
    %v967 = vadd.f32 %v961, %v965
    %s968 = sld [smem:[#allocation5 + $0x82]]
    %v969 = vstv %s968
    %v970 = vmul.f32 %v969, %v942
    %v971 = vmul.f32 %v969, %v943
    %v972 = vadd.f32 %v966, %v970
    %v973 = vadd.f32 %v967, %v971
    %s974 = sld [smem:[#allocation5 + $0x83]]
    %v975 = vstv %s974
    %v976 = vmul.f32 %v975, %v951
    %v977 = vmul.f32 %v975, %v952
    %v978 = vadd.f32 %v972, %v976
    %v979 = vadd.f32 %v973, %v977
    %s980 = sld [smem:[#allocation5 + $0x100]]
    %v981 = vstv %s980
    %v982 = vmul.f32 %v981, %v926
    %v983 = vmul.f32 %v981, %v927
    %s984 = sld [smem:[#allocation5 + $0x101]]
    %v985 = vstv %s984
    %v986 = vmul.f32 %v985, %v933
    %v987 = vmul.f32 %v985, %v934
    %v988 = vadd.f32 %v982, %v986
    %v989 = vadd.f32 %v983, %v987
    %s990 = sld [smem:[#allocation5 + $0x102]]
    %v991 = vstv %s990
    %v992 = vmul.f32 %v991, %v942
    %v993 = vmul.f32 %v991, %v943
    %v994 = vadd.f32 %v988, %v992
    %v995 = vadd.f32 %v989, %v993
    %s996 = sld [smem:[#allocation5 + $0x103]]
    %v997 = vstv %s996
    %v998 = vmul.f32 %v997, %v951
    %v999 = vmul.f32 %v997, %v952
    %v1000 = vadd.f32 %v994, %v998
    %v1001 = vadd.f32 %v995, %v999
    %v1003 = vsel %vm179, %v839, 0
    %1005 = vmatprep.subr.mxu0 0.0
    %1006 = vmatpush1.msra.mxu0 %v956
    %1007 = vmatprep.subr.mxu0 0.0
    %1008 = vmatpush1.msra.mxu0 %v957
    %1009 = vmatprep.subr.mxu0 0.0
    %1010 = vmatpush1.msra.mxu0 0.0
    %1011 = vmatprep.subr.mxu0 0.0
    %1012 = vmatpush1.msra.mxu0 0.0
    %1013 = vmatprep.subr.mxu0 0.0
    %1014 = vmatpush1.msra.mxu0 0.0
    %1015 = vmatprep.subr.mxu0 0.0
    %1016 = vmatpush1.msra.mxu0 0.0
    %1017 = vmatprep.subr.mxu0 0.0
    %1018 = vmatpush1.msra.mxu0 0.0
    %1019 = vmatprep.subr.mxu0 0.0
    %1020 = vmatpush1.msra.mxu0 0.0
    %1021 = vmatprep.subr.mxu0 0.0
    %1022 = vmatpush1.msra.mxu0 0.0
    %1023 = vmatprep.subr.mxu0 0.0
    %1024 = vmatpush1.msra.mxu0 0.0
    %1025 = vmatprep.subr.mxu0 0.0
    %1026 = vmatpush1.msra.mxu0 0.0
    %1027 = vmatprep.subr.mxu0 0.0
    %1028 = vmatpush1.msra.mxu0 0.0
    %1029 = vmatprep.subr.mxu0 0.0
    %1030 = vmatpush1.msra.mxu0 0.0
    %1031 = vmatprep.subr.mxu0 0.0
    %1032 = vmatpush1.msra.mxu0 0.0
    %1033 = vmatprep.subr.mxu0 0.0
    %1034 = vmatpush1.msra.mxu0 0.0
    %1035 = vmatprep.subr.mxu0 0.0
    %1036 = vmatpush1.msra.mxu0 0.0
    %1037 = vmatprep.subr.mxu0 0.0
    %1038 = vmatpush1.msra.mxu0 0.0
    %1039 = vmatprep.subr.mxu0 0.0
    %1040 = vmatpush1.msra.mxu0 0.0
    %1041 = vmatprep.subr.mxu0 0.0
    %1042 = vmatpush1.msra.mxu0 0.0
    %1043 = vmatprep.subr.mxu0 0.0
    %1044 = vmatpush1.msra.mxu0 0.0
    %1045 = vmatprep.subr.mxu0 0.0
    %1046 = vmatpush1.msra.mxu0 0.0
    %1047 = vmatprep.subr.mxu0 0.0
    %1048 = vmatpush1.msra.mxu0 0.0
    %1049 = vmatprep.subr.mxu0 0.0
    %1050 = vmatpush1.msra.mxu0 0.0
    %1051 = vmatprep.subr.mxu0 0.0
    %1052 = vmatpush1.msra.mxu0 0.0
    %1053 = vmatprep.subr.mxu0 0.0
    %1054 = vmatpush1.msra.mxu0 0.0
    %1055 = vmatprep.subr.mxu0 0.0
    %1056 = vmatpush1.msra.mxu0 0.0
    %1057 = vmatprep.subr.mxu0 0.0
    %1058 = vmatpush1.msra.mxu0 0.0
    %1059 = vmatprep.subr.mxu0 0.0
    %1060 = vmatpush1.msra.mxu0 0.0
    %1061 = vmatprep.subr.mxu0 0.0
    %1062 = vmatpush1.msra.mxu0 0.0
    %1063 = vmatprep.subr.mxu0 0.0
    %1064 = vmatpush1.msra.mxu0 0.0
    %1065 = vmatprep.subr.mxu0 0.0
    %1066 = vmatpush1.msra.mxu0 0.0
    %1067 = vmatprep.subr.mxu0 0.0
    %1068 = vmatpush1.msra.mxu0 0.0
    %1069 = vmatprep.mubr.f32.mxu0 0.0
    %1070 = vmatmul.mubr.f32.gmra.mrb[0].mxu0 %v1003
    %v1071 = vpop.f32.mrb[0].mxu0
    %v1072 = vadd.f32 0.0, %v1071
    %v1073 = vpop.f32.mrb[0].mxu0
    %1074 = vdwg.mxu0
    %1075 = vmatprep.subr.mxu0 0.0
    %1076 = vmatpush1.msra.mxu0 %v978
    %1077 = vmatprep.subr.mxu0 0.0
    %1078 = vmatpush1.msra.mxu0 %v979
    %1079 = vmatprep.subr.mxu0 0.0
    %1080 = vmatpush1.msra.mxu0 0.0
    %1081 = vmatprep.subr.mxu0 0.0
    %1082 = vmatpush1.msra.mxu0 0.0
    %1083 = vmatprep.subr.mxu0 0.0
    %1084 = vmatpush1.msra.mxu0 0.0
    %1085 = vmatprep.subr.mxu0 0.0
    %1086 = vmatpush1.msra.mxu0 0.0
    %1087 = vmatprep.subr.mxu0 0.0
    %1088 = vmatpush1.msra.mxu0 0.0
    %1089 = vmatprep.subr.mxu0 0.0
    %1090 = vmatpush1.msra.mxu0 0.0
    %1091 = vmatprep.subr.mxu0 0.0
    %1092 = vmatpush1.msra.mxu0 0.0
    %1093 = vmatprep.subr.mxu0 0.0
    %1094 = vmatpush1.msra.mxu0 0.0
    %1095 = vmatprep.subr.mxu0 0.0
    %1096 = vmatpush1.msra.mxu0 0.0
    %1097 = vmatprep.subr.mxu0 0.0
    %1098 = vmatpush1.msra.mxu0 0.0
    %1099 = vmatprep.subr.mxu0 0.0
    %1100 = vmatpush1.msra.mxu0 0.0
    %1101 = vmatprep.subr.mxu0 0.0
    %1102 = vmatpush1.msra.mxu0 0.0
    %1103 = vmatprep.subr.mxu0 0.0
    %1104 = vmatpush1.msra.mxu0 0.0
    %1105 = vmatprep.subr.mxu0 0.0
    %1106 = vmatpush1.msra.mxu0 0.0
    %1107 = vmatprep.subr.mxu0 0.0
    %1108 = vmatpush1.msra.mxu0 0.0
    %1109 = vmatprep.subr.mxu0 0.0
    %1110 = vmatpush1.msra.mxu0 0.0
    %1111 = vmatprep.subr.mxu0 0.0
    %1112 = vmatpush1.msra.mxu0 0.0
    %1113 = vmatprep.subr.mxu0 0.0
    %1114 = vmatpush1.msra.mxu0 0.0
    %1115 = vmatprep.subr.mxu0 0.0
    %1116 = vmatpush1.msra.mxu0 0.0
    %1117 = vmatprep.subr.mxu0 0.0
    %1118 = vmatpush1.msra.mxu0 0.0
    %1119 = vmatprep.subr.mxu0 0.0
    %1120 = vmatpush1.msra.mxu0 0.0
    %1121 = vmatprep.subr.mxu0 0.0
    %1122 = vmatpush1.msra.mxu0 0.0
    %1123 = vmatprep.subr.mxu0 0.0
    %1124 = vmatpush1.msra.mxu0 0.0
    %1125 = vmatprep.subr.mxu0 0.0
    %1126 = vmatpush1.msra.mxu0 0.0
    %1127 = vmatprep.subr.mxu0 0.0
    %1128 = vmatpush1.msra.mxu0 0.0
    %1129 = vmatprep.subr.mxu0 0.0
    %1130 = vmatpush1.msra.mxu0 0.0
    %1131 = vmatprep.subr.mxu0 0.0
    %1132 = vmatpush1.msra.mxu0 0.0
    %1133 = vmatprep.subr.mxu0 0.0
    %1134 = vmatpush1.msra.mxu0 0.0
    %1135 = vmatprep.subr.mxu0 0.0
    %1136 = vmatpush1.msra.mxu0 0.0
    %1137 = vmatprep.subr.mxu0 0.0
    %1138 = vmatpush1.msra.mxu0 0.0
    %1139 = vmatprep.mubr.f32.mxu0 0.0
    %1140 = vmatmul.mubr.f32.gmra.mrb[0].mxu0 %v1003
    %v1141 = vpop.f32.mrb[0].mxu0
    %v1142 = vadd.f32 0.0, %v1141
    %v1143 = vpop.f32.mrb[0].mxu0
    %1144 = vdwg.mxu0
    %1145 = vmatprep.subr.mxu0 0.0
    %1146 = vmatpush1.msra.mxu0 %v1000
    %1147 = vmatprep.subr.mxu0 0.0
    %1148 = vmatpush1.msra.mxu0 %v1001
    %1149 = vmatprep.subr.mxu0 0.0
    %1150 = vmatpush1.msra.mxu0 0.0
    %1151 = vmatprep.subr.mxu0 0.0
    %1152 = vmatpush1.msra.mxu0 0.0
    %1153 = vmatprep.subr.mxu0 0.0
    %1154 = vmatpush1.msra.mxu0 0.0
    %1155 = vmatprep.subr.mxu0 0.0
    %1156 = vmatpush1.msra.mxu0 0.0
    %1157 = vmatprep.subr.mxu0 0.0
    %1158 = vmatpush1.msra.mxu0 0.0
    %1159 = vmatprep.subr.mxu0 0.0
    %1160 = vmatpush1.msra.mxu0 0.0
    %1161 = vmatprep.subr.mxu0 0.0
    %1162 = vmatpush1.msra.mxu0 0.0
    %1163 = vmatprep.subr.mxu0 0.0
    %1164 = vmatpush1.msra.mxu0 0.0
    %1165 = vmatprep.subr.mxu0 0.0
    %1166 = vmatpush1.msra.mxu0 0.0
    %1167 = vmatprep.subr.mxu0 0.0
    %1168 = vmatpush1.msra.mxu0 0.0
    %1169 = vmatprep.subr.mxu0 0.0
    %1170 = vmatpush1.msra.mxu0 0.0
    %1171 = vmatprep.subr.mxu0 0.0
    %1172 = vmatpush1.msra.mxu0 0.0
    %1173 = vmatprep.subr.mxu0 0.0
    %1174 = vmatpush1.msra.mxu0 0.0
    %1175 = vmatprep.subr.mxu0 0.0
    %1176 = vmatpush1.msra.mxu0 0.0
    %1177 = vmatprep.subr.mxu0 0.0
    %1178 = vmatpush1.msra.mxu0 0.0
    %1179 = vmatprep.subr.mxu0 0.0
    %1180 = vmatpush1.msra.mxu0 0.0
    %1181 = vmatprep.subr.mxu0 0.0
    %1182 = vmatpush1.msra.mxu0 0.0
    %1183 = vmatprep.subr.mxu0 0.0
    %1184 = vmatpush1.msra.mxu0 0.0
    %1185 = vmatprep.subr.mxu0 0.0
    %1186 = vmatpush1.msra.mxu0 0.0
    %1187 = vmatprep.subr.mxu0 0.0
    %1188 = vmatpush1.msra.mxu0 0.0
    %1189 = vmatprep.subr.mxu0 0.0
    %1190 = vmatpush1.msra.mxu0 0.0
    %1191 = vmatprep.subr.mxu0 0.0
    %1192 = vmatpush1.msra.mxu0 0.0
    %1193 = vmatprep.subr.mxu0 0.0
    %1194 = vmatpush1.msra.mxu0 0.0
    %1195 = vmatprep.subr.mxu0 0.0
    %1196 = vmatpush1.msra.mxu0 0.0
    %1197 = vmatprep.subr.mxu0 0.0
    %1198 = vmatpush1.msra.mxu0 0.0
    %1199 = vmatprep.subr.mxu0 0.0
    %1200 = vmatpush1.msra.mxu0 0.0
    %1201 = vmatprep.subr.mxu0 0.0
    %1202 = vmatpush1.msra.mxu0 0.0
    %1203 = vmatprep.subr.mxu0 0.0
    %1204 = vmatpush1.msra.mxu0 0.0
    %1205 = vmatprep.subr.mxu0 0.0
    %1206 = vmatpush1.msra.mxu0 0.0
    %1207 = vmatprep.subr.mxu0 0.0
    %1208 = vmatpush1.msra.mxu0 0.0
    %1209 = vmatprep.mubr.f32.mxu0 0.0
    %1210 = vmatmul.mubr.f32.gmra.mrb[0].mxu0 %v1003
    %v1211 = vpop.f32.mrb[0].mxu0
    %v1212 = vadd.f32 0.0, %v1211
    %v1213 = vpop.f32.mrb[0].mxu0
    %1214 = vdwg.mxu0
    %1215 = vmatprep.subr.mxu0 0.0
    %1216 = vmatpush1.msra.mxu0 %v1072
    %1217 = vmatprep.subr.mxu0 0.0
    %1218 = vmatpush1.msra.mxu0 %v1142
    %1219 = vmatprep.subr.mxu0 0.0
    %1220 = vmatpush1.msra.mxu0 %v1212
    %1221 = vmatprep.subr.mxu0 0.0
    %1222 = vmatpush1.msra.mxu0 0.0
    %1223 = vmatprep.subr.mxu0 0.0
    %1224 = vmatpush1.msra.mxu0 0.0
    %1225 = vmatprep.subr.mxu0 0.0
    %1226 = vmatpush1.msra.mxu0 0.0
    %1227 = vmatprep.subr.mxu0 0.0
    %1228 = vmatpush1.msra.mxu0 0.0
    %1229 = vmatprep.subr.mxu0 0.0
    %1230 = vmatpush1.msra.mxu0 0.0
    %1231 = vmatprep.subr.mxu0 0.0
    %1232 = vmatpush1.msra.mxu0 0.0
    %1233 = vmatprep.subr.mxu0 0.0
    %1234 = vmatpush1.msra.mxu0 0.0
    %1235 = vmatprep.subr.mxu0 0.0
    %1236 = vmatpush1.msra.mxu0 0.0
    %1237 = vmatprep.subr.mxu0 0.0
    %1238 = vmatpush1.msra.mxu0 0.0
    %1239 = vmatprep.subr.mxu0 0.0
    %1240 = vmatpush1.msra.mxu0 0.0
    %1241 = vmatprep.subr.mxu0 0.0
    %1242 = vmatpush1.msra.mxu0 0.0
    %1243 = vmatprep.subr.mxu0 0.0
    %1244 = vmatpush1.msra.mxu0 0.0
    %1245 = vmatprep.subr.mxu0 0.0
    %1246 = vmatpush1.msra.mxu0 0.0
    %1247 = vmatprep.subr.mxu0 0.0
    %1248 = vmatpush1.msra.mxu0 0.0
    %1249 = vmatprep.subr.mxu0 0.0
    %1250 = vmatpush1.msra.mxu0 0.0
    %1251 = vmatprep.subr.mxu0 0.0
    %1252 = vmatpush1.msra.mxu0 0.0
    %1253 = vmatprep.subr.mxu0 0.0
    %1254 = vmatpush1.msra.mxu0 0.0
    %1255 = vmatprep.subr.mxu0 0.0
    %1256 = vmatpush1.msra.mxu0 0.0
    %1257 = vmatprep.subr.mxu0 0.0
    %1258 = vmatpush1.msra.mxu0 0.0
    %1259 = vmatprep.subr.mxu0 0.0
    %1260 = vmatpush1.msra.mxu0 0.0
    %1261 = vmatprep.subr.mxu0 0.0
    %1262 = vmatpush1.msra.mxu0 0.0
    %1263 = vmatprep.subr.mxu0 0.0
    %1264 = vmatpush1.msra.mxu0 0.0
    %1265 = vmatprep.subr.mxu0 0.0
    %1266 = vmatpush1.msra.mxu0 0.0
    %1267 = vmatprep.subr.mxu0 0.0
    %1268 = vmatpush1.msra.mxu0 0.0
    %1269 = vmatprep.subr.mxu0 0.0
    %1270 = vmatpush1.msra.mxu0 0.0
    %1271 = vmatprep.subr.mxu0 0.0
    %1272 = vmatpush1.msra.mxu0 0.0
    %1273 = vmatprep.subr.mxu0 0.0
    %1274 = vmatpush1.msra.mxu0 0.0
    %1275 = vmatprep.subr.mxu0 0.0
    %1276 = vmatpush1.msra.mxu0 0.0
    %1277 = vmatprep.subr.mxu0 0.0
    %1278 = vmatpush1.msra.mxu0 0.0
    %1279 = vmatprep.mubr.f32.mxu0 0.0
    %1280 = vmatmul.mubr.f32.gmra.mrb[0].mxu0 %v395
    %v1281 = vpop.f32.mrb[0].mxu0
    %v1282 = vadd.f32 0.0, %v1281
    %v1283 = vpop.f32.mrb[0].mxu0
    %1284 = vdwg.mxu0
    %vm1285 = vcmp.gt.f32.partialorder %v1282, 0.0
    %v1286 = vmul.f32 %v1282, 0.1
    %v1287 = vsel %vm1285, %v1282, %v1286
    %v1289 = vsel %vm179, %v922, 0
    %1291 = vmatprep.subr.mxu0 0.0
    %1292 = vmatpush1.msra.mxu0 %v956
    %1293 = vmatprep.subr.mxu0 0.0
    %1294 = vmatpush1.msra.mxu0 %v957
    %1295 = vmatprep.subr.mxu0 0.0
    %1296 = vmatpush1.msra.mxu0 0.0
    %1297 = vmatprep.subr.mxu0 0.0
    %1298 = vmatpush1.msra.mxu0 0.0
    %1299 = vmatprep.subr.mxu0 0.0
    %1300 = vmatpush1.msra.mxu0 0.0
    %1301 = vmatprep.subr.mxu0 0.0
    %1302 = vmatpush1.msra.mxu0 0.0
    %1303 = vmatprep.subr.mxu0 0.0
    %1304 = vmatpush1.msra.mxu0 0.0
    %1305 = vmatprep.subr.mxu0 0.0
    %1306 = vmatpush1.msra.mxu0 0.0
    %1307 = vmatprep.subr.mxu0 0.0
    %1308 = vmatpush1.msra.mxu0 0.0
    %1309 = vmatprep.subr.mxu0 0.0
    %1310 = vmatpush1.msra.mxu0 0.0
    %1311 = vmatprep.subr.mxu0 0.0
    %1312 = vmatpush1.msra.mxu0 0.0
    %1313 = vmatprep.subr.mxu0 0.0
    %1314 = vmatpush1.msra.mxu0 0.0
    %1315 = vmatprep.subr.mxu0 0.0
    %1316 = vmatpush1.msra.mxu0 0.0
    %1317 = vmatprep.subr.mxu0 0.0
    %1318 = vmatpush1.msra.mxu0 0.0
    %1319 = vmatprep.subr.mxu0 0.0
    %1320 = vmatpush1.msra.mxu0 0.0
    %1321 = vmatprep.subr.mxu0 0.0
    %1322 = vmatpush1.msra.mxu0 0.0
    %1323 = vmatprep.subr.mxu0 0.0
    %1324 = vmatpush1.msra.mxu0 0.0
    %1325 = vmatprep.subr.mxu0 0.0
    %1326 = vmatpush1.msra.mxu0 0.0
    %1327 = vmatprep.subr.mxu0 0.0
    %1328 = vmatpush1.msra.mxu0 0.0
    %1329 = vmatprep.subr.mxu0 0.0
    %1330 = vmatpush1.msra.mxu0 0.0
    %1331 = vmatprep.subr.mxu0 0.0
    %1332 = vmatpush1.msra.mxu0 0.0
    %1333 = vmatprep.subr.mxu0 0.0
    %1334 = vmatpush1.msra.mxu0 0.0
    %1335 = vmatprep.subr.mxu0 0.0
    %1336 = vmatpush1.msra.mxu0 0.0
    %1337 = vmatprep.subr.mxu0 0.0
    %1338 = vmatpush1.msra.mxu0 0.0
    %1339 = vmatprep.subr.mxu0 0.0
    %1340 = vmatpush1.msra.mxu0 0.0
    %1341 = vmatprep.subr.mxu0 0.0
    %1342 = vmatpush1.msra.mxu0 0.0
    %1343 = vmatprep.subr.mxu0 0.0
    %1344 = vmatpush1.msra.mxu0 0.0
    %1345 = vmatprep.subr.mxu0 0.0
    %1346 = vmatpush1.msra.mxu0 0.0
    %1347 = vmatprep.subr.mxu0 0.0
    %1348 = vmatpush1.msra.mxu0 0.0
    %1349 = vmatprep.subr.mxu0 0.0
    %1350 = vmatpush1.msra.mxu0 0.0
    %1351 = vmatprep.subr.mxu0 0.0
    %1352 = vmatpush1.msra.mxu0 0.0
    %1353 = vmatprep.subr.mxu0 0.0
    %1354 = vmatpush1.msra.mxu0 0.0
    %1355 = vmatprep.mubr.f32.mxu0 0.0
    %1356 = vmatmul.mubr.f32.gmra.mrb[0].mxu0 %v1289
    %v1357 = vpop.f32.mrb[0].mxu0
    %v1358 = vadd.f32 0.0, %v1357
    %v1359 = vpop.f32.mrb[0].mxu0
    %1360 = vdwg.mxu0
    %1361 = vmatprep.subr.mxu0 0.0
    %1362 = vmatpush1.msra.mxu0 %v978
    %1363 = vmatprep.subr.mxu0 0.0
    %1364 = vmatpush1.msra.mxu0 %v979
    %1365 = vmatprep.subr.mxu0 0.0
    %1366 = vmatpush1.msra.mxu0 0.0
    %1367 = vmatprep.subr.mxu0 0.0
    %1368 = vmatpush1.msra.mxu0 0.0
    %1369 = vmatprep.subr.mxu0 0.0
    %1370 = vmatpush1.msra.mxu0 0.0
    %1371 = vmatprep.subr.mxu0 0.0
    %1372 = vmatpush1.msra.mxu0 0.0
    %1373 = vmatprep.subr.mxu0 0.0
    %1374 = vmatpush1.msra.mxu0 0.0
    %1375 = vmatprep.subr.mxu0 0.0
    %1376 = vmatpush1.msra.mxu0 0.0
    %1377 = vmatprep.subr.mxu0 0.0
    %1378 = vmatpush1.msra.mxu0 0.0
    %1379 = vmatprep.subr.mxu0 0.0
    %1380 = vmatpush1.msra.mxu0 0.0
    %1381 = vmatprep.subr.mxu0 0.0
    %1382 = vmatpush1.msra.mxu0 0.0
    %1383 = vmatprep.subr.mxu0 0.0
    %1384 = vmatpush1.msra.mxu0 0.0
    %1385 = vmatprep.subr.mxu0 0.0
    %1386 = vmatpush1.msra.mxu0 0.0
    %1387 = vmatprep.subr.mxu0 0.0
    %1388 = vmatpush1.msra.mxu0 0.0
    %1389 = vmatprep.subr.mxu0 0.0
    %1390 = vmatpush1.msra.mxu0 0.0
    %1391 = vmatprep.subr.mxu0 0.0
    %1392 = vmatpush1.msra.mxu0 0.0
    %1393 = vmatprep.subr.mxu0 0.0
    %1394 = vmatpush1.msra.mxu0 0.0
    %1395 = vmatprep.subr.mxu0 0.0
    %1396 = vmatpush1.msra.mxu0 0.0
    %1397 = vmatprep.subr.mxu0 0.0
    %1398 = vmatpush1.msra.mxu0 0.0
    %1399 = vmatprep.subr.mxu0 0.0
    %1400 = vmatpush1.msra.mxu0 0.0
    %1401 = vmatprep.subr.mxu0 0.0
    %1402 = vmatpush1.msra.mxu0 0.0
    %1403 = vmatprep.subr.mxu0 0.0
    %1404 = vmatpush1.msra.mxu0 0.0
    %1405 = vmatprep.subr.mxu0 0.0
    %1406 = vmatpush1.msra.mxu0 0.0
    %1407 = vmatprep.subr.mxu0 0.0
    %1408 = vmatpush1.msra.mxu0 0.0
    %1409 = vmatprep.subr.mxu0 0.0
    %1410 = vmatpush1.msra.mxu0 0.0
    %1411 = vmatprep.subr.mxu0 0.0
    %1412 = vmatpush1.msra.mxu0 0.0
    %1413 = vmatprep.subr.mxu0 0.0
    %1414 = vmatpush1.msra.mxu0 0.0
    %1415 = vmatprep.subr.mxu0 0.0
    %1416 = vmatpush1.msra.mxu0 0.0
    %1417 = vmatprep.subr.mxu0 0.0
    %1418 = vmatpush1.msra.mxu0 0.0
    %1419 = vmatprep.subr.mxu0 0.0
    %1420 = vmatpush1.msra.mxu0 0.0
    %1421 = vmatprep.subr.mxu0 0.0
    %1422 = vmatpush1.msra.mxu0 0.0
    %1423 = vmatprep.subr.mxu0 0.0
    %1424 = vmatpush1.msra.mxu0 0.0
    %1425 = vmatprep.mubr.f32.mxu0 0.0
    %1426 = vmatmul.mubr.f32.gmra.mrb[0].mxu0 %v1289
    %v1427 = vpop.f32.mrb[0].mxu0
    %v1428 = vadd.f32 0.0, %v1427
    %v1429 = vpop.f32.mrb[0].mxu0
    %1430 = vdwg.mxu0
    %1431 = vmatprep.subr.mxu0 0.0
    %1432 = vmatpush1.msra.mxu0 %v1000
    %1433 = vmatprep.subr.mxu0 0.0
    %1434 = vmatpush1.msra.mxu0 %v1001
    %1435 = vmatprep.subr.mxu0 0.0
    %1436 = vmatpush1.msra.mxu0 0.0
    %1437 = vmatprep.subr.mxu0 0.0
    %1438 = vmatpush1.msra.mxu0 0.0
    %1439 = vmatprep.subr.mxu0 0.0
    %1440 = vmatpush1.msra.mxu0 0.0
    %1441 = vmatprep.subr.mxu0 0.0
    %1442 = vmatpush1.msra.mxu0 0.0
    %1443 = vmatprep.subr.mxu0 0.0
    %1444 = vmatpush1.msra.mxu0 0.0
    %1445 = vmatprep.subr.mxu0 0.0
    %1446 = vmatpush1.msra.mxu0 0.0
    %1447 = vmatprep.subr.mxu0 0.0
    %1448 = vmatpush1.msra.mxu0 0.0
    %1449 = vmatprep.subr.mxu0 0.0
    %1450 = vmatpush1.msra.mxu0 0.0
    %1451 = vmatprep.subr.mxu0 0.0
    %1452 = vmatpush1.msra.mxu0 0.0
    %1453 = vmatprep.subr.mxu0 0.0
    %1454 = vmatpush1.msra.mxu0 0.0
    %1455 = vmatprep.subr.mxu0 0.0
    %1456 = vmatpush1.msra.mxu0 0.0
    %1457 = vmatprep.subr.mxu0 0.0
    %1458 = vmatpush1.msra.mxu0 0.0
    %1459 = vmatprep.subr.mxu0 0.0
    %1460 = vmatpush1.msra.mxu0 0.0
    %1461 = vmatprep.subr.mxu0 0.0
    %1462 = vmatpush1.msra.mxu0 0.0
    %1463 = vmatprep.subr.mxu0 0.0
    %1464 = vmatpush1.msra.mxu0 0.0
    %1465 = vmatprep.subr.mxu0 0.0
    %1466 = vmatpush1.msra.mxu0 0.0
    %1467 = vmatprep.subr.mxu0 0.0
    %1468 = vmatpush1.msra.mxu0 0.0
    %1469 = vmatprep.subr.mxu0 0.0
    %1470 = vmatpush1.msra.mxu0 0.0
    %1471 = vmatprep.subr.mxu0 0.0
    %1472 = vmatpush1.msra.mxu0 0.0
    %1473 = vmatprep.subr.mxu0 0.0
    %1474 = vmatpush1.msra.mxu0 0.0
    %1475 = vmatprep.subr.mxu0 0.0
    %1476 = vmatpush1.msra.mxu0 0.0
    %1477 = vmatprep.subr.mxu0 0.0
    %1478 = vmatpush1.msra.mxu0 0.0
    %1479 = vmatprep.subr.mxu0 0.0
    %1480 = vmatpush1.msra.mxu0 0.0
    %1481 = vmatprep.subr.mxu0 0.0
    %1482 = vmatpush1.msra.mxu0 0.0
    %1483 = vmatprep.subr.mxu0 0.0
    %1484 = vmatpush1.msra.mxu0 0.0
    %1485 = vmatprep.subr.mxu0 0.0
    %1486 = vmatpush1.msra.mxu0 0.0
    %1487 = vmatprep.subr.mxu0 0.0
    %1488 = vmatpush1.msra.mxu0 0.0
    %1489 = vmatprep.subr.mxu0 0.0
    %1490 = vmatpush1.msra.mxu0 0.0
    %1491 = vmatprep.subr.mxu0 0.0
    %1492 = vmatpush1.msra.mxu0 0.0
    %1493 = vmatprep.subr.mxu0 0.0
    %1494 = vmatpush1.msra.mxu0 0.0
    %1495 = vmatprep.mubr.f32.mxu0 0.0
    %1496 = vmatmul.mubr.f32.gmra.mrb[0].mxu0 %v1289
    %v1497 = vpop.f32.mrb[0].mxu0
    %v1498 = vadd.f32 0.0, %v1497
    %v1499 = vpop.f32.mrb[0].mxu0
    %1500 = vdwg.mxu0
    %1501 = vmatprep.subr.mxu0 0.0
    %1502 = vmatpush1.msra.mxu0 %v1358
    %1503 = vmatprep.subr.mxu0 0.0
    %1504 = vmatpush1.msra.mxu0 %v1428
    %1505 = vmatprep.subr.mxu0 0.0
    %1506 = vmatpush1.msra.mxu0 %v1498
    %1507 = vmatprep.subr.mxu0 0.0
    %1508 = vmatpush1.msra.mxu0 0.0
    %1509 = vmatprep.subr.mxu0 0.0
    %1510 = vmatpush1.msra.mxu0 0.0
    %1511 = vmatprep.subr.mxu0 0.0
    %1512 = vmatpush1.msra.mxu0 0.0
    %1513 = vmatprep.subr.mxu0 0.0
    %1514 = vmatpush1.msra.mxu0 0.0
    %1515 = vmatprep.subr.mxu0 0.0
    %1516 = vmatpush1.msra.mxu0 0.0
    %1517 = vmatprep.subr.mxu0 0.0
    %1518 = vmatpush1.msra.mxu0 0.0
    %1519 = vmatprep.subr.mxu0 0.0
    %1520 = vmatpush1.msra.mxu0 0.0
    %1521 = vmatprep.subr.mxu0 0.0
    %1522 = vmatpush1.msra.mxu0 0.0
    %1523 = vmatprep.subr.mxu0 0.0
    %1524 = vmatpush1.msra.mxu0 0.0
    %1525 = vmatprep.subr.mxu0 0.0
    %1526 = vmatpush1.msra.mxu0 0.0
    %1527 = vmatprep.subr.mxu0 0.0
    %1528 = vmatpush1.msra.mxu0 0.0
    %1529 = vmatprep.subr.mxu0 0.0
    %1530 = vmatpush1.msra.mxu0 0.0
    %1531 = vmatprep.subr.mxu0 0.0
    %1532 = vmatpush1.msra.mxu0 0.0
    %1533 = vmatprep.subr.mxu0 0.0
    %1534 = vmatpush1.msra.mxu0 0.0
    %1535 = vmatprep.subr.mxu0 0.0
    %1536 = vmatpush1.msra.mxu0 0.0
    %1537 = vmatprep.subr.mxu0 0.0
    %1538 = vmatpush1.msra.mxu0 0.0
    %1539 = vmatprep.subr.mxu0 0.0
    %1540 = vmatpush1.msra.mxu0 0.0
    %1541 = vmatprep.subr.mxu0 0.0
    %1542 = vmatpush1.msra.mxu0 0.0
    %1543 = vmatprep.subr.mxu0 0.0
    %1544 = vmatpush1.msra.mxu0 0.0
    %1545 = vmatprep.subr.mxu0 0.0
    %1546 = vmatpush1.msra.mxu0 0.0
    %1547 = vmatprep.subr.mxu0 0.0
    %1548 = vmatpush1.msra.mxu0 0.0
    %1549 = vmatprep.subr.mxu0 0.0
    %1550 = vmatpush1.msra.mxu0 0.0
    %1551 = vmatprep.subr.mxu0 0.0
    %1552 = vmatpush1.msra.mxu0 0.0
    %1553 = vmatprep.subr.mxu0 0.0
    %1554 = vmatpush1.msra.mxu0 0.0
    %1555 = vmatprep.subr.mxu0 0.0
    %1556 = vmatpush1.msra.mxu0 0.0
    %1557 = vmatprep.subr.mxu0 0.0
    %1558 = vmatpush1.msra.mxu0 0.0
    %1559 = vmatprep.subr.mxu0 0.0
    %1560 = vmatpush1.msra.mxu0 0.0
    %1561 = vmatprep.subr.mxu0 0.0
    %1562 = vmatpush1.msra.mxu0 0.0
    %1563 = vmatprep.subr.mxu0 0.0
    %1564 = vmatpush1.msra.mxu0 0.0
    %1565 = vmatprep.mubr.f32.mxu0 0.0
    %1566 = vmatmul.mubr.f32.gmra.mrb[0].mxu0 %v684
    %v1567 = vpop.f32.mrb[0].mxu0
    %v1568 = vadd.f32 0.0, %v1567
    %v1569 = vpop.f32.mrb[0].mxu0
    %1570 = vdwg.mxu0
    %vm1571 = vcmp.gt.f32.partialorder %v1568, 0.0
    %v1572 = vmul.f32 %v1568, 0.1
    %v1573 = vsel %vm1571, %v1568, %v1572
    %v1574 = vld [vmem:[%s12] sm:$0xff]
    %v1575 = vld [vmem:[%s12 + $0x8] sm:$0xff]
    %v1576 = vld [vmem:[%s13] sm:$0x1]
    %v1578 = vlaneseq
    %v1579 = vshrl.u32 %v1578, 7
    %v1580 = vsub.s32 0, %v1579
    %v1581 = vrot.slane %v1576, %v1580
    %v1584 = vsel %vm179, %v1573, 0
    %1586 = vmatprep.subr.mxu0 0.0
    %1587 = vmatpush1.msra.mxu0 %v1574
    %1588 = vmatprep.subr.mxu0 0.0
    %1589 = vmatpush1.msra.mxu0 %v1575
    %1590 = vmatprep.subr.mxu0 0.0
    %1591 = vmatpush1.msra.mxu0 0.0
    %1592 = vmatprep.subr.mxu0 0.0
    %1593 = vmatpush1.msra.mxu0 0.0
    %1594 = vmatprep.subr.mxu0 0.0
    %1595 = vmatpush1.msra.mxu0 0.0
    %1596 = vmatprep.subr.mxu0 0.0
    %1597 = vmatpush1.msra.mxu0 0.0
    %1598 = vmatprep.subr.mxu0 0.0
    %1599 = vmatpush1.msra.mxu0 0.0
    %1600 = vmatprep.subr.mxu0 0.0
    %1601 = vmatpush1.msra.mxu0 0.0
    %1602 = vmatprep.subr.mxu0 0.0
    %1603 = vmatpush1.msra.mxu0 0.0
    %1604 = vmatprep.subr.mxu0 0.0
    %1605 = vmatpush1.msra.mxu0 0.0
    %1606 = vmatprep.subr.mxu0 0.0
    %1607 = vmatpush1.msra.mxu0 0.0
    %1608 = vmatprep.subr.mxu0 0.0
    %1609 = vmatpush1.msra.mxu0 0.0
    %1610 = vmatprep.subr.mxu0 0.0
    %1611 = vmatpush1.msra.mxu0 0.0
    %1612 = vmatprep.subr.mxu0 0.0
    %1613 = vmatpush1.msra.mxu0 0.0
    %1614 = vmatprep.subr.mxu0 0.0
    %1615 = vmatpush1.msra.mxu0 0.0
    %1616 = vmatprep.subr.mxu0 0.0
    %1617 = vmatpush1.msra.mxu0 0.0
    %1618 = vmatprep.subr.mxu0 0.0
    %1619 = vmatpush1.msra.mxu0 0.0
    %1620 = vmatprep.subr.mxu0 0.0
    %1621 = vmatpush1.msra.mxu0 0.0
    %1622 = vmatprep.subr.mxu0 0.0
    %1623 = vmatpush1.msra.mxu0 0.0
    %1624 = vmatprep.subr.mxu0 0.0
    %1625 = vmatpush1.msra.mxu0 0.0
    %1626 = vmatprep.subr.mxu0 0.0
    %1627 = vmatpush1.msra.mxu0 0.0
    %1628 = vmatprep.subr.mxu0 0.0
    %1629 = vmatpush1.msra.mxu0 0.0
    %1630 = vmatprep.subr.mxu0 0.0
    %1631 = vmatpush1.msra.mxu0 0.0
    %1632 = vmatprep.subr.mxu0 0.0
    %1633 = vmatpush1.msra.mxu0 0.0
    %1634 = vmatprep.subr.mxu0 0.0
    %1635 = vmatpush1.msra.mxu0 0.0
    %1636 = vmatprep.subr.mxu0 0.0
    %1637 = vmatpush1.msra.mxu0 0.0
    %1638 = vmatprep.subr.mxu0 0.0
    %1639 = vmatpush1.msra.mxu0 0.0
    %1640 = vmatprep.subr.mxu0 0.0
    %1641 = vmatpush1.msra.mxu0 0.0
    %1642 = vmatprep.subr.mxu0 0.0
    %1643 = vmatpush1.msra.mxu0 0.0
    %1644 = vmatprep.subr.mxu0 0.0
    %1645 = vmatpush1.msra.mxu0 0.0
    %1646 = vmatprep.subr.mxu0 0.0
    %1647 = vmatpush1.msra.mxu0 0.0
    %1648 = vmatprep.subr.mxu0 0.0
    %1649 = vmatpush1.msra.mxu0 0.0
    %1650 = vmatprep.mubr.f32.mxu0 0.0
    %1651 = vmatmul.mubr.f32.gmra.mrb[0].mxu0 %v1584
    %v1652 = vpop.f32.mrb[0].mxu0
    %v1653 = vadd.f32 %v1581, %v1652
    %v1654 = vpop.f32.mrb[0].mxu0
    %1655 = vdwg.mxu0
    %v1656 = vld [vmem:[%s14] sm:$0xff]
    %v1657 = vld [vmem:[%s14 + $0x8] sm:$0xff]
    %v1658 = vld [vmem:[%s15] sm:$0x1]
    %v1660 = vlaneseq
    %v1661 = vshrl.u32 %v1660, 7
    %v1662 = vsub.s32 0, %v1661
    %v1663 = vrot.slane %v1658, %v1662
    %v1666 = vsel %vm179, %v1287, 0
    %1668 = vmatprep.subr.mxu0 0.0
    %1669 = vmatpush1.msra.mxu0 %v1656
    %1670 = vmatprep.subr.mxu0 0.0
    %1671 = vmatpush1.msra.mxu0 %v1657
    %1672 = vmatprep.subr.mxu0 0.0
    %1673 = vmatpush1.msra.mxu0 0.0
    %1674 = vmatprep.subr.mxu0 0.0
    %1675 = vmatpush1.msra.mxu0 0.0
    %1676 = vmatprep.subr.mxu0 0.0
    %1677 = vmatpush1.msra.mxu0 0.0
    %1678 = vmatprep.subr.mxu0 0.0
    %1679 = vmatpush1.msra.mxu0 0.0
    %1680 = vmatprep.subr.mxu0 0.0
    %1681 = vmatpush1.msra.mxu0 0.0
    %1682 = vmatprep.subr.mxu0 0.0
    %1683 = vmatpush1.msra.mxu0 0.0
    %1684 = vmatprep.subr.mxu0 0.0
    %1685 = vmatpush1.msra.mxu0 0.0
    %1686 = vmatprep.subr.mxu0 0.0
    %1687 = vmatpush1.msra.mxu0 0.0
    %1688 = vmatprep.subr.mxu0 0.0
    %1689 = vmatpush1.msra.mxu0 0.0
    %1690 = vmatprep.subr.mxu0 0.0
    %1691 = vmatpush1.msra.mxu0 0.0
    %1692 = vmatprep.subr.mxu0 0.0
    %1693 = vmatpush1.msra.mxu0 0.0
    %1694 = vmatprep.subr.mxu0 0.0
    %1695 = vmatpush1.msra.mxu0 0.0
    %1696 = vmatprep.subr.mxu0 0.0
    %1697 = vmatpush1.msra.mxu0 0.0
    %1698 = vmatprep.subr.mxu0 0.0
    %1699 = vmatpush1.msra.mxu0 0.0
    %1700 = vmatprep.subr.mxu0 0.0
    %1701 = vmatpush1.msra.mxu0 0.0
    %1702 = vmatprep.subr.mxu0 0.0
    %1703 = vmatpush1.msra.mxu0 0.0
    %1704 = vmatprep.subr.mxu0 0.0
    %1705 = vmatpush1.msra.mxu0 0.0
    %1706 = vmatprep.subr.mxu0 0.0
    %1707 = vmatpush1.msra.mxu0 0.0
    %1708 = vmatprep.subr.mxu0 0.0
    %1709 = vmatpush1.msra.mxu0 0.0
    %1710 = vmatprep.subr.mxu0 0.0
    %1711 = vmatpush1.msra.mxu0 0.0
    %1712 = vmatprep.subr.mxu0 0.0
    %1713 = vmatpush1.msra.mxu0 0.0
    %1714 = vmatprep.subr.mxu0 0.0
    %1715 = vmatpush1.msra.mxu0 0.0
    %1716 = vmatprep.subr.mxu0 0.0
    %1717 = vmatpush1.msra.mxu0 0.0
    %1718 = vmatprep.subr.mxu0 0.0
    %1719 = vmatpush1.msra.mxu0 0.0
    %1720 = vmatprep.subr.mxu0 0.0
    %1721 = vmatpush1.msra.mxu0 0.0
    %1722 = vmatprep.subr.mxu0 0.0
    %1723 = vmatpush1.msra.mxu0 0.0
    %1724 = vmatprep.subr.mxu0 0.0
    %1725 = vmatpush1.msra.mxu0 0.0
    %1726 = vmatprep.subr.mxu0 0.0
    %1727 = vmatpush1.msra.mxu0 0.0
    %1728 = vmatprep.subr.mxu0 0.0
    %1729 = vmatpush1.msra.mxu0 0.0
    %1730 = vmatprep.subr.mxu0 0.0
    %1731 = vmatpush1.msra.mxu0 0.0
    %1732 = vmatprep.mubr.f32.mxu0 0.0
    %1733 = vmatmul.mubr.f32.gmra.mrb[0].mxu0 %v1666
    %v1734 = vpop.f32.mrb[0].mxu0
    %v1735 = vadd.f32 %v1663, %v1734
    %v1736 = vpop.f32.mrb[0].mxu0
    %1737 = vdwg.mxu0
    %v1738 = vmul.f32 %v1653, 0.5
    %v1739 = vadd.f32 %v839, %v1738
    %v1740 = vmul.f32 %v1735, 0.5
    %v1741 = vadd.f32 %v922, %v1740
    %1742 = vst.msk [vmem:[#allocation7] sm:$0xff] %vm179, %v1739
    %1743 = vst.msk [vmem:[#allocation8] sm:$0xff] %vm179, %v1741
    %v1744 = vld [vmem:[%s18] sm:$0xff]
    %vm1745 = vcmask 64512
    %v1747 = vsel %vm1745, %v1744, 0
    %1749 = vmatprep.subr.mxu0 0.0
    %1750 = vmatpush1.msra.mxu0 %v1739
    %1751 = vmatprep.subr.mxu0 0.0
    %1752 = vmatpush1.msra.mxu0 0.0
    %1753 = vmatprep.subr.mxu0 0.0
    %1754 = vmatpush1.msra.mxu0 0.0
    %1755 = vmatprep.subr.mxu0 0.0
    %1756 = vmatpush1.msra.mxu0 0.0
    %1757 = vmatprep.subr.mxu0 0.0
    %1758 = vmatpush1.msra.mxu0 0.0
    %1759 = vmatprep.subr.mxu0 0.0
    %1760 = vmatpush1.msra.mxu0 0.0
    %1761 = vmatprep.subr.mxu0 0.0
    %1762 = vmatpush1.msra.mxu0 0.0
    %1763 = vmatprep.subr.mxu0 0.0
    %1764 = vmatpush1.msra.mxu0 0.0
    %1765 = vmatprep.subr.mxu0 0.0
    %1766 = vmatpush1.msra.mxu0 0.0
    %1767 = vmatprep.subr.mxu0 0.0
    %1768 = vmatpush1.msra.mxu0 0.0
    %1769 = vmatprep.subr.mxu0 0.0
    %1770 = vmatpush1.msra.mxu0 0.0
    %1771 = vmatprep.subr.mxu0 0.0
    %1772 = vmatpush1.msra.mxu0 0.0
    %1773 = vmatprep.subr.mxu0 0.0
    %1774 = vmatpush1.msra.mxu0 0.0
    %1775 = vmatprep.subr.mxu0 0.0
    %1776 = vmatpush1.msra.mxu0 0.0
    %1777 = vmatprep.subr.mxu0 0.0
    %1778 = vmatpush1.msra.mxu0 0.0
    %1779 = vmatprep.subr.mxu0 0.0
    %1780 = vmatpush1.msra.mxu0 0.0
    %1781 = vmatprep.subr.mxu0 0.0
    %1782 = vmatpush1.msra.mxu0 0.0
    %1783 = vmatprep.subr.mxu0 0.0
    %1784 = vmatpush1.msra.mxu0 0.0
    %1785 = vmatprep.subr.mxu0 0.0
    %1786 = vmatpush1.msra.mxu0 0.0
    %1787 = vmatprep.subr.mxu0 0.0
    %1788 = vmatpush1.msra.mxu0 0.0
    %1789 = vmatprep.subr.mxu0 0.0
    %1790 = vmatpush1.msra.mxu0 0.0
    %1791 = vmatprep.subr.mxu0 0.0
    %1792 = vmatpush1.msra.mxu0 0.0
    %1793 = vmatprep.subr.mxu0 0.0
    %1794 = vmatpush1.msra.mxu0 0.0
    %1795 = vmatprep.subr.mxu0 0.0
    %1796 = vmatpush1.msra.mxu0 0.0
    %1797 = vmatprep.subr.mxu0 0.0
    %1798 = vmatpush1.msra.mxu0 0.0
    %1799 = vmatprep.subr.mxu0 0.0
    %1800 = vmatpush1.msra.mxu0 0.0
    %1801 = vmatprep.subr.mxu0 0.0
    %1802 = vmatpush1.msra.mxu0 0.0
    %1803 = vmatprep.subr.mxu0 0.0
    %1804 = vmatpush1.msra.mxu0 0.0
    %1805 = vmatprep.subr.mxu0 0.0
    %1806 = vmatpush1.msra.mxu0 0.0
    %1807 = vmatprep.subr.mxu0 0.0
    %1808 = vmatpush1.msra.mxu0 0.0
    %1809 = vmatprep.subr.mxu0 0.0
    %1810 = vmatpush1.msra.mxu0 0.0
    %1811 = vmatprep.subr.mxu0 0.0
    %1812 = vmatpush1.msra.mxu0 0.0
    %1813 = vmatprep.mubr.f32.mxu0 0.0
    %1814 = vmatmul.mubr.f32.gmra.mrb[0].mxu0 %v1747
    %v1815 = vpop.f32.mrb[0].mxu0
    %v1816 = vadd.f32 0.0, %v1815
    %v1817 = vpop.f32.mrb[0].mxu0
    %1818 = vdwg.mxu0
    %v1819 = vld [vmem:[%s19] sm:$0xff]
    %v1821 = vsel %vm1745, %v1819, 0
    %1823 = vmatprep.subr.mxu0 0.0
    %1824 = vmatpush1.msra.mxu0 %v1741
    %1825 = vmatprep.subr.mxu0 0.0
    %1826 = vmatpush1.msra.mxu0 0.0
    %1827 = vmatprep.subr.mxu0 0.0
    %1828 = vmatpush1.msra.mxu0 0.0
    %1829 = vmatprep.subr.mxu0 0.0
    %1830 = vmatpush1.msra.mxu0 0.0
    %1831 = vmatprep.subr.mxu0 0.0
    %1832 = vmatpush1.msra.mxu0 0.0
    %1833 = vmatprep.subr.mxu0 0.0
    %1834 = vmatpush1.msra.mxu0 0.0
    %1835 = vmatprep.subr.mxu0 0.0
    %1836 = vmatpush1.msra.mxu0 0.0
    %1837 = vmatprep.subr.mxu0 0.0
    %1838 = vmatpush1.msra.mxu0 0.0
    %1839 = vmatprep.subr.mxu0 0.0
    %1840 = vmatpush1.msra.mxu0 0.0
    %1841 = vmatprep.subr.mxu0 0.0
    %1842 = vmatpush1.msra.mxu0 0.0
    %1843 = vmatprep.subr.mxu0 0.0
    %1844 = vmatpush1.msra.mxu0 0.0
    %1845 = vmatprep.subr.mxu0 0.0
    %1846 = vmatpush1.msra.mxu0 0.0
    %1847 = vmatprep.subr.mxu0 0.0
    %1848 = vmatpush1.msra.mxu0 0.0
    %1849 = vmatprep.subr.mxu0 0.0
    %1850 = vmatpush1.msra.mxu0 0.0
    %1851 = vmatprep.subr.mxu0 0.0
    %1852 = vmatpush1.msra.mxu0 0.0
    %1853 = vmatprep.subr.mxu0 0.0
    %1854 = vmatpush1.msra.mxu0 0.0
    %1855 = vmatprep.subr.mxu0 0.0
    %1856 = vmatpush1.msra.mxu0 0.0
    %1857 = vmatprep.subr.mxu0 0.0
    %1858 = vmatpush1.msra.mxu0 0.0
    %1859 = vmatprep.subr.mxu0 0.0
    %1860 = vmatpush1.msra.mxu0 0.0
    %1861 = vmatprep.subr.mxu0 0.0
    %1862 = vmatpush1.msra.mxu0 0.0
    %1863 = vmatprep.subr.mxu0 0.0
    %1864 = vmatpush1.msra.mxu0 0.0
    %1865 = vmatprep.subr.mxu0 0.0
    %1866 = vmatpush1.msra.mxu0 0.0
    %1867 = vmatprep.subr.mxu0 0.0
    %1868 = vmatpush1.msra.mxu0 0.0
    %1869 = vmatprep.subr.mxu0 0.0
    %1870 = vmatpush1.msra.mxu0 0.0
    %1871 = vmatprep.subr.mxu0 0.0
    %1872 = vmatpush1.msra.mxu0 0.0
    %1873 = vmatprep.subr.mxu0 0.0
    %1874 = vmatpush1.msra.mxu0 0.0
    %1875 = vmatprep.subr.mxu0 0.0
    %1876 = vmatpush1.msra.mxu0 0.0
    %1877 = vmatprep.subr.mxu0 0.0
    %1878 = vmatpush1.msra.mxu0 0.0
    %1879 = vmatprep.subr.mxu0 0.0
    %1880 = vmatpush1.msra.mxu0 0.0
    %1881 = vmatprep.subr.mxu0 0.0
    %1882 = vmatpush1.msra.mxu0 0.0
    %1883 = vmatprep.subr.mxu0 0.0
    %1884 = vmatpush1.msra.mxu0 0.0
    %1885 = vmatprep.subr.mxu0 0.0
    %1886 = vmatpush1.msra.mxu0 0.0
    %1887 = vmatprep.mubr.f32.mxu0 0.0
    %1888 = vmatmul.mubr.f32.gmra.mrb[0].mxu0 %v1821
    %v1889 = vpop.f32.mrb[0].mxu0
    %v1890 = vadd.f32 0.0, %v1889
    %v1891 = vpop.f32.mrb[0].mxu0
    %1892 = vdwg.mxu0
    %v1893 = vld [vmem:[%s16] sm:$0xff]
    %v1894 = vld [vmem:[%s16 + $0x8] sm:$0xff]
    %v1896 = vsel %vm179, %v1816, 0
    %1898 = vmatprep.subr.mxu0 0.0
    %1899 = vmatpush1.msra.mxu0 %v1893
    %1900 = vmatprep.subr.mxu0 0.0
    %1901 = vmatpush1.msra.mxu0 %v1894
    %1902 = vmatprep.subr.mxu0 0.0
    %1903 = vmatpush1.msra.mxu0 0.0
    %1904 = vmatprep.subr.mxu0 0.0
    %1905 = vmatpush1.msra.mxu0 0.0
    %1906 = vmatprep.subr.mxu0 0.0
    %1907 = vmatpush1.msra.mxu0 0.0
    %1908 = vmatprep.subr.mxu0 0.0
    %1909 = vmatpush1.msra.mxu0 0.0
    %1910 = vmatprep.subr.mxu0 0.0
    %1911 = vmatpush1.msra.mxu0 0.0
    %1912 = vmatprep.subr.mxu0 0.0
    %1913 = vmatpush1.msra.mxu0 0.0
    %1914 = vmatprep.subr.mxu0 0.0
    %1915 = vmatpush1.msra.mxu0 0.0
    %1916 = vmatprep.subr.mxu0 0.0
    %1917 = vmatpush1.msra.mxu0 0.0
    %1918 = vmatprep.subr.mxu0 0.0
    %1919 = vmatpush1.msra.mxu0 0.0
    %1920 = vmatprep.subr.mxu0 0.0
    %1921 = vmatpush1.msra.mxu0 0.0
    %1922 = vmatprep.subr.mxu0 0.0
    %1923 = vmatpush1.msra.mxu0 0.0
    %1924 = vmatprep.subr.mxu0 0.0
    %1925 = vmatpush1.msra.mxu0 0.0
    %1926 = vmatprep.subr.mxu0 0.0
    %1927 = vmatpush1.msra.mxu0 0.0
    %1928 = vmatprep.subr.mxu0 0.0
    %1929 = vmatpush1.msra.mxu0 0.0
    %1930 = vmatprep.subr.mxu0 0.0
    %1931 = vmatpush1.msra.mxu0 0.0
    %1932 = vmatprep.subr.mxu0 0.0
    %1933 = vmatpush1.msra.mxu0 0.0
    %1934 = vmatprep.subr.mxu0 0.0
    %1935 = vmatpush1.msra.mxu0 0.0
    %1936 = vmatprep.subr.mxu0 0.0
    %1937 = vmatpush1.msra.mxu0 0.0
    %1938 = vmatprep.subr.mxu0 0.0
    %1939 = vmatpush1.msra.mxu0 0.0
    %1940 = vmatprep.subr.mxu0 0.0
    %1941 = vmatpush1.msra.mxu0 0.0
    %1942 = vmatprep.subr.mxu0 0.0
    %1943 = vmatpush1.msra.mxu0 0.0
    %1944 = vmatprep.subr.mxu0 0.0
    %1945 = vmatpush1.msra.mxu0 0.0
    %1946 = vmatprep.subr.mxu0 0.0
    %1947 = vmatpush1.msra.mxu0 0.0
    %1948 = vmatprep.subr.mxu0 0.0
    %1949 = vmatpush1.msra.mxu0 0.0
    %1950 = vmatprep.subr.mxu0 0.0
    %1951 = vmatpush1.msra.mxu0 0.0
    %1952 = vmatprep.subr.mxu0 0.0
    %1953 = vmatpush1.msra.mxu0 0.0
    %1954 = vmatprep.subr.mxu0 0.0
    %1955 = vmatpush1.msra.mxu0 0.0
    %1956 = vmatprep.subr.mxu0 0.0
    %1957 = vmatpush1.msra.mxu0 0.0
    %1958 = vmatprep.subr.mxu0 0.0
    %1959 = vmatpush1.msra.mxu0 0.0
    %1960 = vmatprep.subr.mxu0 0.0
    %1961 = vmatpush1.msra.mxu0 0.0
    %1962 = vmatprep.mubr.f32.mxu0 0.0
    %1963 = vmatmul.mubr.f32.gmra.mrb[0].mxu0 %v1896
    %v1964 = vpop.f32.mrb[0].mxu0
    %v1965 = vadd.f32 0.0, %v1964
    %v1966 = vpop.f32.mrb[0].mxu0
    %1967 = vdwg.mxu0
    %v1968 = vmul.f32 %v1965, %v1890
    %v1969 = vsel %vm179, %v1968, 0.0
    %1970 = vadd.xlane.f32.xlu0 %v1969
    %v1971 = vpop.xlane.xlu0 %1970
    %v1972 = vld [vmem:[%s17] sm:$0x1]
    %v1973 = vlaneseq
    %v1974 = vshrl.u32 %v1973, 7
    %v1975 = vsub.s32 0, %v1974
    %v1976 = vrot.slane %v1972, %v1975
    %v1977 = vmul.f32 %v1971, %v1976
    %v1978 = vadd.f32 %v1977, 0.0
    %s1979 = scalar_lea.vmem %s16, 16
    %v1980 = vld [vmem:[%s1979] sm:$0xff]
    %v1981 = vld [vmem:[%s1979 + $0x8] sm:$0xff]
    %1982 = vmatprep.subr.mxu0 0.0
    %1983 = vmatpush1.msra.mxu0 %v1980
    %1984 = vmatprep.subr.mxu0 0.0
    %1985 = vmatpush1.msra.mxu0 %v1981
    %1986 = vmatprep.subr.mxu0 0.0
    %1987 = vmatpush1.msra.mxu0 0.0
    %1988 = vmatprep.subr.mxu0 0.0
    %1989 = vmatpush1.msra.mxu0 0.0
    %1990 = vmatprep.subr.mxu0 0.0
    %1991 = vmatpush1.msra.mxu0 0.0
    %1992 = vmatprep.subr.mxu0 0.0
    %1993 = vmatpush1.msra.mxu0 0.0
    %1994 = vmatprep.subr.mxu0 0.0
    %1995 = vmatpush1.msra.mxu0 0.0
    %1996 = vmatprep.subr.mxu0 0.0
    %1997 = vmatpush1.msra.mxu0 0.0
    %1998 = vmatprep.subr.mxu0 0.0
    %1999 = vmatpush1.msra.mxu0 0.0
    %2000 = vmatprep.subr.mxu0 0.0
    %2001 = vmatpush1.msra.mxu0 0.0
    %2002 = vmatprep.subr.mxu0 0.0
    %2003 = vmatpush1.msra.mxu0 0.0
    %2004 = vmatprep.subr.mxu0 0.0
    %2005 = vmatpush1.msra.mxu0 0.0
    %2006 = vmatprep.subr.mxu0 0.0
    %2007 = vmatpush1.msra.mxu0 0.0
    %2008 = vmatprep.subr.mxu0 0.0
    %2009 = vmatpush1.msra.mxu0 0.0
    %2010 = vmatprep.subr.mxu0 0.0
    %2011 = vmatpush1.msra.mxu0 0.0
    %2012 = vmatprep.subr.mxu0 0.0
    %2013 = vmatpush1.msra.mxu0 0.0
    %2014 = vmatprep.subr.mxu0 0.0
    %2015 = vmatpush1.msra.mxu0 0.0
    %2016 = vmatprep.subr.mxu0 0.0
    %2017 = vmatpush1.msra.mxu0 0.0
    %2018 = vmatprep.subr.mxu0 0.0
    %2019 = vmatpush1.msra.mxu0 0.0
    %2020 = vmatprep.subr.mxu0 0.0
    %2021 = vmatpush1.msra.mxu0 0.0
    %2022 = vmatprep.subr.mxu0 0.0
    %2023 = vmatpush1.msra.mxu0 0.0
    %2024 = vmatprep.subr.mxu0 0.0
    %2025 = vmatpush1.msra.mxu0 0.0
    %2026 = vmatprep.subr.mxu0 0.0
    %2027 = vmatpush1.msra.mxu0 0.0
    %2028 = vmatprep.subr.mxu0 0.0
    %2029 = vmatpush1.msra.mxu0 0.0
    %2030 = vmatprep.subr.mxu0 0.0
    %2031 = vmatpush1.msra.mxu0 0.0
    %2032 = vmatprep.subr.mxu0 0.0
    %2033 = vmatpush1.msra.mxu0 0.0
    %2034 = vmatprep.subr.mxu0 0.0
    %2035 = vmatpush1.msra.mxu0 0.0
    %2036 = vmatprep.subr.mxu0 0.0
    %2037 = vmatpush1.msra.mxu0 0.0
    %2038 = vmatprep.subr.mxu0 0.0
    %2039 = vmatpush1.msra.mxu0 0.0
    %2040 = vmatprep.subr.mxu0 0.0
    %2041 = vmatpush1.msra.mxu0 0.0
    %2042 = vmatprep.subr.mxu0 0.0
    %2043 = vmatpush1.msra.mxu0 0.0
    %2044 = vmatprep.subr.mxu0 0.0
    %2045 = vmatpush1.msra.mxu0 0.0
    %2046 = vmatprep.mubr.f32.mxu0 0.0
    %2047 = vmatmul.mubr.f32.gmra.mrb[0].mxu0 %v1896
    %v2048 = vpop.f32.mrb[0].mxu0
    %v2049 = vadd.f32 0.0, %v2048
    %v2050 = vpop.f32.mrb[0].mxu0
    %2051 = vdwg.mxu0
    %v2052 = vmul.f32 %v2049, %v1890
    %v2053 = vsel %vm179, %v2052, 0.0
    %2054 = vadd.xlane.f32.xlu0 %v2053
    %v2055 = vpop.xlane.xlu0 %2054
    %v2056 = vld [vmem:[%s17 + $0x1] sm:$0x1]
    %v2057 = vlaneseq
    %v2058 = vshrl.u32 %v2057, 7
    %v2059 = vsub.s32 0, %v2058
    %v2060 = vrot.slane %v2056, %v2059
    %v2061 = vmul.f32 %v2055, %v2060
    %v2062 = vadd.f32 %v1978, %v2061
    %vm2063 = vcmask 23552
    %2064 = vst.msk [vmem:[%s20] sm:$0xff] %vm2063, %v2062
    %2065 = vst.msk [vmem:[#allocation10] sm:$0xff] %vm393, %v133
    %2066 = vst.msk [vmem:[#allocation10 + $0x8] sm:$0xff] %vm393, %v134
    %s2067 = scalar_lea.vmem [#allocation10], 16
    %2068 = vst.msk [vmem:[%s2067] sm:$0xff] %vm393, %v155
    %2069 = vst.msk [vmem:[%s2067 + $0x8] sm:$0xff] %vm393, %v156
    %v2070 = vmul.f32 %v155, %v133
    %v2071 = vmul.f32 %v156, %v134
    %v2072 = vsel %vm393, %v2070, 0.0
    %2073 = vadd.xlane.f32.xlu0 %v2072
    %v2074 = vpop.xlane.xlu0 %2073
    %v2075 = vsel %vm393, %v2071, 0.0
    %2076 = vadd.xlane.f32.xlu0 %v2075
    %v2077 = vpop.xlane.xlu0 %2076
    %v2078 = vmul.f32 %v155, %v155
    %v2079 = vmul.f32 %v156, %v156
    %v2080 = vsel %vm393, %v2078, 0.0
    %2081 = vadd.xlane.f32.xlu0 %v2080
    %v2082 = vpop.xlane.xlu0 %2081
    %v2083 = vsel %vm393, %v2079, 0.0
    %2084 = vadd.xlane.f32.xlu0 %v2083
    %v2085 = vpop.xlane.xlu0 %2084
    %v2086 = vmul.f32 %v133, %v133
    %v2087 = vmul.f32 %v134, %v134
    %v2088 = vsel %vm393, %v2086, 0.0
    %2089 = vadd.xlane.f32.xlu0 %v2088
    %v2090 = vpop.xlane.xlu0 %2089
    %v2091 = vsel %vm393, %v2087, 0.0
    %2092 = vadd.xlane.f32.xlu0 %v2091
    %v2093 = vpop.xlane.xlu0 %2092
    %v2094 = vmax.f32 %v2082, 1e-16
    %v2095 = vmax.f32 %v2085, 1e-16
    %v2096 = vrsqrt.pop %v2094
    %v2097 = vrsqrt.pop %v2095
    %v2098 = vmul.f32 %v2074, %v2096
    %v2099 = vmul.f32 %v2077, %v2097
    %v2100 = vmax.f32 %v2090, 1e-16
    %v2101 = vmax.f32 %v2093, 1e-16
    %v2102 = vrsqrt.pop %v2100
    %v2103 = vrsqrt.pop %v2101
    %v2104 = vmul.f32 %v2098, %v2102
    %v2105 = vmul.f32 %v2099, %v2103
    %v2106 = vadd.f32 %v2104, %v2105
    %v2107 = vrot.slane %v2106, 4
    %v2108 = vadd.f32 %v2106, %v2107
    %v2109 = vrot.slane %v2108, 2
    %v2110 = vadd.f32 %v2108, %v2109
    %v2111 = vrot.slane %v2110, 1
    %v2112 = vadd.f32 %v2110, %v2111
    %v2113 = vsub.f32 0.0, %v2112
    %s2114 = scalar_lea.vmem [#allocation10], 32
    %2115 = vst.msk [vmem:[%s2114] sm:$0xff] %vm393, %v177
    %2116 = vst.msk [vmem:[%s2114 + $0x8] sm:$0xff] %vm393, %v178
    %v2117 = vmul.f32 %v177, %v155
    %v2118 = vmul.f32 %v178, %v156
    %v2119 = vsel %vm393, %v2117, 0.0
    %2120 = vadd.xlane.f32.xlu0 %v2119
    %v2121 = vpop.xlane.xlu0 %2120
    %v2122 = vsel %vm393, %v2118, 0.0
    %2123 = vadd.xlane.f32.xlu0 %v2122
    %v2124 = vpop.xlane.xlu0 %2123
    %v2125 = vmul.f32 %v177, %v177
    %v2126 = vmul.f32 %v178, %v178
    %v2127 = vsel %vm393, %v2125, 0.0
    %2128 = vadd.xlane.f32.xlu0 %v2127
    %v2129 = vpop.xlane.xlu0 %2128
    %v2130 = vsel %vm393, %v2126, 0.0
    %2131 = vadd.xlane.f32.xlu0 %v2130
    %v2132 = vpop.xlane.xlu0 %2131
    %v2133 = vmax.f32 %v2129, 1e-16
    %v2134 = vmax.f32 %v2132, 1e-16
    %v2135 = vrsqrt.pop %v2133
    %v2136 = vrsqrt.pop %v2134
    %v2137 = vmul.f32 %v2121, %v2135
    %v2138 = vmul.f32 %v2124, %v2136
    %v2139 = vmul.f32 %v2137, %v2096
    %v2140 = vmul.f32 %v2138, %v2097
    %v2141 = vadd.f32 %v2139, %v2140
    %v2142 = vrot.slane %v2141, 4
    %v2143 = vadd.f32 %v2141, %v2142
    %v2144 = vrot.slane %v2143, 2
    %v2145 = vadd.f32 %v2143, %v2144
    %v2146 = vrot.slane %v2145, 1
    %v2147 = vadd.f32 %v2145, %v2146
    %v2148 = vsub.f32 %v2113, %v2147
    %vm2149 = vcmask 0
    %2150 = vst.msk [vmem:[#allocation11] sm:$0x1] %vm2149, %v2148
    // Predicated region
    $region90: #{net_forward.1} parent=1 // pred_check
      _
    $region91: #{net_forward.1} parent=1 // pred_check_branch
      %2152 = sbr.rel (0) target = $region93
    $region92: #{net_forward.1} parent=1 // pred_region
      _
    $region93: #{net_forward.1} parent=1 // pred_fallthru
      _
    // Predicated region
    $region94: #{net_forward.1} parent=1 // pred_check
      _
    $region95: #{net_forward.1} parent=1 // pred_check_branch
      %2154 = sbr.rel (0) target = $region97
    $region96: #{net_forward.1} parent=1 // pred_region
      %s2156 = ssub.s32 128, 128
      %2157 = vsyncadd [#allocation3], %s2156
      %s2159 = sshll.u32 [#allocation7], 4
      %s2160 = int_to_ptr.vmem [resolvable:$true] %s2159
      %2162 = dma.vmem_to_hbm [thread:$0]  %s2160, 128, %s21, [#allocation3]
    $region97: #{net_forward.1} parent=1 // pred_fallthru
      _
    // Predicated region
    $region98: #{net_forward.1} parent=1 // pred_check
      _
    $region99: #{net_forward.1} parent=1 // pred_check_branch
      %2164 = sbr.rel (0) target = $region101
    $region100: #{net_forward.1} parent=1 // pred_region
      %s2166 = ssub.s32 128, 128
      %2167 = vsyncadd [#allocation9], %s2166
      %s2169 = sshll.u32 [#allocation8], 4
      %s2170 = int_to_ptr.vmem [resolvable:$true] %s2169
      %2172 = dma.vmem_to_hbm [thread:$0]  %s2170, 128, %s22, [#allocation9]
    $region101: #{net_forward.1} parent=1 // pred_fallthru
      _
    // Predicated region
    $region102: #{net_forward.1} parent=1 // pred_check
      _
    $region103: #{net_forward.1} parent=1 // pred_check_branch
      %2174 = sbr.rel (0) target = $region105
    $region104: #{net_forward.1} parent=1 // pred_region
      %s2176 = ssub.s32 768, 768
      %2177 = vsyncadd [#allocation9], %s2176
      %s2178 = sshll.u32 [#allocation10], 4
      %s2179 = int_to_ptr.vmem [resolvable:$true] %s2178
      %2184 = dma.vmem_to_hbm [thread:$0]  %s2179, 768, %s23, [#allocation9], 128, 128, 8
    $region105: #{net_forward.1} parent=1 // pred_fallthru
      _
    // Predicated region
    $region106: #{net_forward.1} parent=1 // pred_check
      _
    $region107: #{net_forward.1} parent=1 // pred_check_branch
      %2186 = sbr.rel (0) target = $region109
    $region108: #{net_forward.1} parent=1 // pred_region
      %s2188 = ssub.s32 16, 16
      %2189 = vsyncadd [#allocation12], %s2188
      %s2191 = sshll.u32 [#allocation11], 4
      %s2192 = int_to_ptr.vmem [resolvable:$true] %s2191
      %2194 = dma.vmem_to_hbm [thread:$0]  %s2192, 16, %s24, [#allocation12]
    $region109: #{net_forward.1} parent=1 // pred_fallthru
      _
    // Predicated region
    $region110: #{net_forward.1} parent=1 // pred_check
      _
    $region111: #{net_forward.1} parent=1 // pred_check_branch
      %2196 = sbr.rel (0) target = $region113
    $region112: #{net_forward.1} parent=1 // pred_region
      _
    $region113: #{net_forward.1} parent=1 // pred_fallthru
      _
    // Predicated region
    $region114: #{net_forward.1} parent=1 // pred_check
      _
    $region115: #{net_forward.1} parent=1 // pred_check_branch
      %2198 = sbr.rel (0) target = $region117
    $region116: #{net_forward.1} parent=1 // pred_region
      %2199 = dma.done [#allocation3], 128
    $region117: #{net_forward.1} parent=1 // pred_fallthru
      _
    // Predicated region
    $region118: #{net_forward.1} parent=1 // pred_check
      _
    $region119: #{net_forward.1} parent=1 // pred_check_branch
      %2201 = sbr.rel (0) target = $region121
    $region120: #{net_forward.1} parent=1 // pred_region
      %2202 = dma.done [#allocation9], 128
    $region121: #{net_forward.1} parent=1 // pred_fallthru
      _
    // Predicated region
    $region122: #{net_forward.1} parent=1 // pred_check
      _
    $region123: #{net_forward.1} parent=1 // pred_check_branch
      %2204 = sbr.rel (0) target = $region125
    $region124: #{net_forward.1} parent=1 // pred_region
      %2205 = dma.done [#allocation9], 768
    $region125: #{net_forward.1} parent=1 // pred_fallthru
      _
    // Predicated region
    $region126: #{net_forward.1} parent=1 // pred_check
      _
    $region127: #{net_forward.1} parent=1 // pred_check_branch
      %2207 = sbr.rel (0) target = $region129
    $region128: #{net_forward.1} parent=1 // pred_region
      %2208 = dma.done [#allocation12], 16
    $region129: #{net_forward.1} parent=1 // pred_fallthru
      _
    %2209 = vsyncpa [#allocation3], 1
    %2210 = vsyncpa [#allocation9], 1
    %2211 = vsyncpa [#allocation12], 1
    %2212 = vsyncpa [#allocation4], 1
    %2213 = vsyncpa [#allocation6], 1

</llo_original>
